<compile_context>
chip_gen: v7x
topology: tpu7x:2x2x1
jax: 0.10.0
libtpu: 0.0.40
codegen_flags: <defaults>
</compile_context>

<pallas_src>
import math
from functools import partial

import jax
import jax.numpy as jnp
from jax import lax
from jax.experimental import pallas as pl
from jax.experimental.pallas import tpu as pltpu


def _round_up(x, m):
    return (x + m - 1) // m * m


def _pick_vmem_limit():
    # Per-generation limit: leave Mosaic scratch headroom, never exceed physical
    # capacity (v7x: 64 MiB -> ~48 MiB usable; v5e/v6e: 128 MiB -> up to ~100 MiB).
    try:
        cap = int(pltpu.get_tpu_info().vmem_capacity_bytes)
    except Exception:
        cap = 128 * 1024 * 1024
    return max(32 * 1024 * 1024, min(cap - 16 * 1024 * 1024, 100 * 1024 * 1024))


# --------------------------------------------------------------------------- #
# Pallas kernel: conv(K,1)+BN (folded) via per-tap MXU accumulation, then a
# precomputed per-frame gate applied in the flattened (rows, Cout_p) layout.
# --------------------------------------------------------------------------- #
def unit_tcn_kernel(x_ref, w_ref, b_ref, g_ref, o_ref, *, Tt, V, K):
    # x_ref : (1, (T_pad + K - 1) * V, Cin_p)  whole-sample rows (t,v), T halo-padded
    # w_ref : (K, Cin_p, Cout_p)               per-tap conv weight (BN scale folded)
    # b_ref : (1, Cout_p)                      fused conv bias + BN shift (f32)
    # g_ref : (1, Tt*V, 1)                     per-row gate = sigmoid(relu(frame)) + 1
    # o_ref : (1, Tt*V, Cout_p)
    t = pl.program_id(1)
    rows = Tt * V

    acc = None
    for k in range(K):                          # static unroll: K per-tap MXU matmuls
        off = t * rows + k * V
        if V % 8 == 0:
            off = pl.multiple_of(off, 8)
        xk = x_ref[0, pl.ds(off, rows), :]      # (rows, Cin_p), no copies materialized
        part = jnp.dot(xk, w_ref[k], preferred_element_type=jnp.float32)
        acc = part if acc is None else acc + part

    y = acc + b_ref[...]                        # (rows, Cout_p) f32
    # single VPU sweep: gate broadcast over lanes, lane-dense unmasked store
    o_ref[0] = (y * g_ref[0]).astype(o_ref.dtype)


# --------------------------------------------------------------------------- #
# Wrapper (layout plumbing, parameter folding, gate precompute, tiling)
# --------------------------------------------------------------------------- #
def unit_tcn_forward(x_nchw, params, *, kernel_size=5, fa_kernel=9, eps=1e-5,
                     compute_dtype=jnp.bfloat16, t_tile=64):
    N, Cin, T, V = x_nchw.shape
    Cout = params["conv_w"].shape[0]
    K, KF = kernel_size, fa_kernel
    assert K % 2 == 1 and KF % 2 == 1, "only odd kernels ('same' padding) supported"
    pad = (K - 1) // 2
    padf = (KF - 1) // 2

    Cin_p = _round_up(Cin, 128)
    Cout_p = _round_up(Cout, 128)

    # ---- fold eval-mode BN (scale/shift) + conv bias into conv weight / one bias
    scale = params["bn_gamma"] / jnp.sqrt(params["bn_var"] + eps)          # (Cout,)
    shift = params["bn_beta"] - params["bn_mean"] * scale
    w = jnp.transpose(params["conv_w"][:, :, :, 0], (2, 1, 0))             # (K,Cin,Cout)
    w = w * scale[None, None, :]
    b = params["conv_b"] * scale + shift                                   # (Cout,)

    # ---- frame-attention gate from the pooled INPUT (exact: mean over V commutes
    #      with the (K,1) conv and the per-channel BN affine).  Tiny f32 compute.
    px = jnp.mean(x_nchw.astype(jnp.float32), axis=3)                      # (N,Cin,T)
    px = jnp.transpose(px, (0, 2, 1))                                      # (N,T,Cin)
    pxp = jnp.pad(px, ((0, 0), (pad, pad), (0, 0)))
    py = b[None, None, :] + sum(pxp[:, k:k + T, :] @ w[k] for k in range(K))
    pyp = jnp.pad(py, ((0, 0), (padf, padf), (0, 0)))                      # (N,T+KF-1,Cout)
    frame = params["fa_b"][0] + sum(pyp[:, j:j + T, :] @ params["fa_w"][0, :, j]
                                    for j in range(KF))                    # (N,T)
    gate = jax.nn.sigmoid(jnp.maximum(frame, 0.0)) + 1.0                   # (N,T) f32

    # ---- T row-tiling (Tt frames/tile; conv halo handled by the T zero-pad below)
    if T <= t_tile:
        Tt = T
    else:
        Tt = max(8, (t_tile // 8) * 8)
    n_t = (T + Tt - 1) // Tt
    T_pad = n_t * Tt
    rows = Tt * V

    # (N,C,T,V) -> (N,T,V,C); one jnp.pad covers T halo (+ round-up) and channel pad.
    x = jnp.transpose(x_nchw, (0, 2, 3, 1))                                # (N,T,V,Cin)
    x = jnp.pad(x, ((0, 0), (pad, T_pad - T + pad), (0, 0), (0, Cin_p - Cin)))
    x = x.reshape(N, (T_pad + 2 * pad) * V, Cin_p).astype(compute_dtype)

    w_p = jnp.pad(w, ((0, 0), (0, Cin_p - Cin), (0, Cout_p - Cout))).astype(compute_dtype)
    b_p = jnp.pad(b, (0, Cout_p - Cout)).reshape(1, Cout_p).astype(jnp.float32)

    gate_rows = jnp.pad(gate, ((0, 0), (0, T_pad - T)))
    gate_rows = jnp.broadcast_to(gate_rows[:, :, None, None], (N, T_pad, V, 1))
    gate_rows = gate_rows.reshape(N, T_pad * V, 1).astype(jnp.float32)

    out = pl.pallas_call(
        partial(unit_tcn_kernel, Tt=Tt, V=V, K=K),
        out_shape=jax.ShapeDtypeStruct((N, T_pad * V, Cout_p), compute_dtype),
        grid=(N, n_t),
        in_specs=[
            # whole-sample input block: resident across T tiles of a sample
            pl.BlockSpec((1, (T_pad + 2 * pad) * V, Cin_p), lambda n, t: (n, 0, 0)),
            pl.BlockSpec((K, Cin_p, Cout_p), lambda n, t: (0, 0, 0)),
            pl.BlockSpec((1, Cout_p), lambda n, t: (0, 0)),
            pl.BlockSpec((1, rows, 1), lambda n, t: (n, t, 0)),
        ],
        out_specs=pl.BlockSpec((1, rows, Cout_p), lambda n, t: (n, t, 0)),
        compiler_params=pltpu.CompilerParams(
            dimension_semantics=("parallel", "parallel"),
            vmem_limit_bytes=_pick_vmem_limit()),
    )(x, w_p, b_p, gate_rows)

    out = out[:, :T * V, :Cout].reshape(N, T, V, Cout)
    return jnp.transpose(out, (0, 3, 1, 2)).astype(x_nchw.dtype)   # NCHW (N,Cout,T,V)


# --------------------------------------------------------------------------- #
# Deterministic parameter init (mirrors conv_init / bn_init / default Conv1d)
# --------------------------------------------------------------------------- #
def init_params(key, in_channels, out_channels, *, kernel_size=5, fa_kernel=9):
    k1, k2, k3 = jax.random.split(key, 3)
    # conv_init: kaiming_normal_(mode='fan_out') -> std = sqrt(2 / fan_out)
    fan_out = out_channels * kernel_size * 1
    conv_w = math.sqrt(2.0 / fan_out) * jax.random.normal(
        k1, (out_channels, in_channels, kernel_size, 1), jnp.float32)
    conv_b = jnp.zeros((out_channels,), jnp.float32)
    # bn_init(bn, 1): gamma = 1, beta = 0; running stats at init values
    bn_gamma = jnp.ones((out_channels,), jnp.float32)
    bn_beta = jnp.zeros((out_channels,), jnp.float32)
    bn_mean = jnp.zeros((out_channels,), jnp.float32)
    bn_var = jnp.ones((out_channels,), jnp.float32)
    # frame_attention Conv1d default init (uniform +/- 1/sqrt(fan_in))
    fan_in = out_channels * fa_kernel
    bound = 1.0 / math.sqrt(fan_in)
    fa_w = jax.random.uniform(k2, (1, out_channels, fa_kernel), jnp.float32,
                              -bound, bound)
    fa_b = jax.random.uniform(k3, (1,), jnp.float32, -bound, bound)
    return dict(conv_w=conv_w, conv_b=conv_b, bn_gamma=bn_gamma, bn_beta=bn_beta,
                bn_mean=bn_mean, bn_var=bn_var, fa_w=fa_w, fa_b=fa_b)


# --------------------------------------------------------------------------- #
# Pure-JAX reference (for correctness check)
# --------------------------------------------------------------------------- #
def unit_tcn_reference(x_nchw, params, *, kernel_size=5, fa_kernel=9, eps=1e-5):
    pad = (kernel_size - 1) // 2
    y = lax.conv_general_dilated(
        x_nchw, params["conv_w"], window_strides=(1, 1),
        padding=((pad, pad), (0, 0)),
        dimension_numbers=("NCHW", "OIHW", "NCHW"))
    y = y + params["conv_b"][None, :, None, None]
    scale = params["bn_gamma"] / jnp.sqrt(params["bn_var"] + eps)
    shift = params["bn_beta"] - params["bn_mean"] * scale
    y = y * scale[None, :, None, None] + shift[None, :, None, None]
    pooled = jnp.mean(y, axis=3)                                   # (N, C, T)
    fpad = (fa_kernel - 1) // 2
    frame = lax.conv_general_dilated(
        pooled, params["fa_w"], window_strides=(1,), padding=((fpad, fpad),),
        dimension_numbers=("NCH", "OIH", "NCH"))
    frame = frame + params["fa_b"][None, :, None]
    score = jax.nn.sigmoid(jnp.maximum(frame, 0.0))[:, :, :, None]  # (N,1,T,1)
    return y * score + y


# --------------------------------------------------------------------------- #
if __name__ == "__main__":
    key = jax.random.PRNGKey(0)
    kx, kp = jax.random.split(key)

    N, Cin, T, V = 2, 4, 16, 16
    Cout = 8
    x = jax.random.normal(kx, (N, Cin, T, V), jnp.float32)
    params = init_params(kp, Cin, Cout)

    ref = jax.block_until_ready(unit_tcn_reference(x, params))

    # f32 compute path (tight tolerance)
    out_f32 = jax.block_until_ready(
        unit_tcn_forward(x, params, compute_dtype=jnp.float32))
    assert out_f32.shape == (N, Cout, T, V)
    assert jnp.allclose(out_f32, ref, atol=1e-4, rtol=1e-4), (
        float(jnp.max(jnp.abs(out_f32 - ref))))

    # bf16 compute path (default; looser tolerance for input/output quantization)
    out_bf16 = jax.block_until_ready(unit_tcn_forward(x, params))
    assert out_bf16.shape == (N, Cout, T, V)
    assert jnp.allclose(out_bf16, ref, atol=5e-2, rtol=5e-2), (
        float(jnp.max(jnp.abs(out_bf16 - ref))))

    # exercise the multi-tile (T-tiled) path as well
    out_tiled = jax.block_until_ready(
        unit_tcn_forward(x, params, compute_dtype=jnp.float32, t_tile=8))
    assert jnp.allclose(out_tiled, ref, atol=1e-4, rtol=1e-4), (
        float(jnp.max(jnp.abs(out_tiled - ref))))

    print("KERNEL_OK")
</pallas_src>

<mosaic_0001>
module attributes {stable_mosaic.version = 11 : i64} {
  func.func @unit_tcn_kernel(%arg0: i32, %arg1: i32, %arg2: memref<1x320x128xf32, #tpu.memory_space<vmem>>, %arg3: memref<5x128x128xf32, #tpu.memory_space<vmem>>, %arg4: memref<1x128xf32, #tpu.memory_space<vmem>>, %arg5: memref<1x256x1xf32, #tpu.memory_space<vmem>>, %arg6: memref<1x256x128xf32, #tpu.memory_space<vmem>>) attributes {dimension_semantics = [#tpu.dimension_semantics<parallel>, #tpu.dimension_semantics<parallel>], iteration_bounds = array<i64: 2, 1>, scalar_prefetch = 0 : i64, scratch_operands = 0 : i64, tpu.core_type = #tpu.core_type<tc>, window_params = [{transform_indices = @transform_0, window_bounds = array<i64: 1, 320, 128>}, {pipeline_mode = #tpu.pipeline_mode<synchronous>, transform_indices = @transform_1, window_bounds = array<i64: 5, 128, 128>}, {pipeline_mode = #tpu.pipeline_mode<synchronous>, transform_indices = @transform_2, window_bounds = array<i64: 1, 128>}, {transform_indices = @transform_3, window_bounds = array<i64: 1, 256, 1>}, {transform_indices = @transform_4, window_bounds = array<i64: 1, 256, 128>}]} {
    %c256_i32 = arith.constant 256 : i32
    %0 = arith.muli %arg1, %c256_i32 : i32
    %c0_i32 = arith.constant 0 : i32
    %1 = arith.addi %0, %c0_i32 : i32
    %2 = tpu.assume_multiple %1, 8 : i32
    %c0 = arith.constant 0 : index
    %3 = arith.index_cast %2 : i32 to index
    %c0_0 = arith.constant 0 : index
    %4 = vector.load %arg2[%c0, %3, %c0_0] : memref<1x320x128xf32, #tpu.memory_space<vmem>>, vector<1x256x128xf32>
    %5 = vector.shape_cast %4 : vector<1x256x128xf32> to vector<256x128xf32>
    %c0_1 = arith.constant 0 : index
    %c0_2 = arith.constant 0 : index
    %c0_3 = arith.constant 0 : index
    %6 = vector.load %arg3[%c0_1, %c0_2, %c0_3] : memref<5x128x128xf32, #tpu.memory_space<vmem>>, vector<1x128x128xf32>
    %7 = vector.shape_cast %6 : vector<1x128x128xf32> to vector<128x128xf32>
    %cst = arith.constant dense<0.000000e+00> : vector<256x128xf32>
    %8 = tpu.matmul %5, %7, %cst {dimension_numbers = #tpu.dot_dimension_numbers<[1], [0], [0], [1], [0, 0, 1, 1], [], []>} : vector<256x128xf32>, vector<128x128xf32>, vector<256x128xf32> -> vector<256x128xf32>
    %c256_i32_4 = arith.constant 256 : i32
    %9 = arith.muli %arg1, %c256_i32_4 : i32
    %c16_i32 = arith.constant 16 : i32
    %10 = arith.addi %9, %c16_i32 : i32
    %11 = tpu.assume_multiple %10, 8 : i32
    %c0_5 = arith.constant 0 : index
    %12 = arith.index_cast %11 : i32 to index
    %c0_6 = arith.constant 0 : index
    %13 = vector.load %arg2[%c0_5, %12, %c0_6] : memref<1x320x128xf32, #tpu.memory_space<vmem>>, vector<1x256x128xf32>
    %14 = vector.shape_cast %13 : vector<1x256x128xf32> to vector<256x128xf32>
    %c1 = arith.constant 1 : index
    %c0_7 = arith.constant 0 : index
    %c0_8 = arith.constant 0 : index
    %15 = vector.load %arg3[%c1, %c0_7, %c0_8] : memref<5x128x128xf32, #tpu.memory_space<vmem>>, vector<1x128x128xf32>
    %16 = vector.shape_cast %15 : vector<1x128x128xf32> to vector<128x128xf32>
    %cst_9 = arith.constant dense<0.000000e+00> : vector<256x128xf32>
    %17 = tpu.matmul %14, %16, %cst_9 {dimension_numbers = #tpu.dot_dimension_numbers<[1], [0], [0], [1], [0, 0, 1, 1], [], []>} : vector<256x128xf32>, vector<128x128xf32>, vector<256x128xf32> -> vector<256x128xf32>
    %18 = arith.addf %8, %17 : vector<256x128xf32>
    %c256_i32_10 = arith.constant 256 : i32
    %19 = arith.muli %arg1, %c256_i32_10 : i32
    %c32_i32 = arith.constant 32 : i32
    %20 = arith.addi %19, %c32_i32 : i32
    %21 = tpu.assume_multiple %20, 8 : i32
    %c0_11 = arith.constant 0 : index
    %22 = arith.index_cast %21 : i32 to index
    %c0_12 = arith.constant 0 : index
    %23 = vector.load %arg2[%c0_11, %22, %c0_12] : memref<1x320x128xf32, #tpu.memory_space<vmem>>, vector<1x256x128xf32>
    %24 = vector.shape_cast %23 : vector<1x256x128xf32> to vector<256x128xf32>
    %c2 = arith.constant 2 : index
    %c0_13 = arith.constant 0 : index
    %c0_14 = arith.constant 0 : index
    %25 = vector.load %arg3[%c2, %c0_13, %c0_14] : memref<5x128x128xf32, #tpu.memory_space<vmem>>, vector<1x128x128xf32>
    %26 = vector.shape_cast %25 : vector<1x128x128xf32> to vector<128x128xf32>
    %cst_15 = arith.constant dense<0.000000e+00> : vector<256x128xf32>
    %27 = tpu.matmul %24, %26, %cst_15 {dimension_numbers = #tpu.dot_dimension_numbers<[1], [0], [0], [1], [0, 0, 1, 1], [], []>} : vector<256x128xf32>, vector<128x128xf32>, vector<256x128xf32> -> vector<256x128xf32>
    %28 = arith.addf %18, %27 : vector<256x128xf32>
    %c256_i32_16 = arith.constant 256 : i32
    %29 = arith.muli %arg1, %c256_i32_16 : i32
    %c48_i32 = arith.constant 48 : i32
    %30 = arith.addi %29, %c48_i32 : i32
    %31 = tpu.assume_multiple %30, 8 : i32
    %c0_17 = arith.constant 0 : index
    %32 = arith.index_cast %31 : i32 to index
    %c0_18 = arith.constant 0 : index
    %33 = vector.load %arg2[%c0_17, %32, %c0_18] : memref<1x320x128xf32, #tpu.memory_space<vmem>>, vector<1x256x128xf32>
    %34 = vector.shape_cast %33 : vector<1x256x128xf32> to vector<256x128xf32>
    %c3 = arith.constant 3 : index
    %c0_19 = arith.constant 0 : index
    %c0_20 = arith.constant 0 : index
    %35 = vector.load %arg3[%c3, %c0_19, %c0_20] : memref<5x128x128xf32, #tpu.memory_space<vmem>>, vector<1x128x128xf32>
    %36 = vector.shape_cast %35 : vector<1x128x128xf32> to vector<128x128xf32>
    %cst_21 = arith.constant dense<0.000000e+00> : vector<256x128xf32>
    %37 = tpu.matmul %34, %36, %cst_21 {dimension_numbers = #tpu.dot_dimension_numbers<[1], [0], [0], [1], [0, 0, 1, 1], [], []>} : vector<256x128xf32>, vector<128x128xf32>, vector<256x128xf32> -> vector<256x128xf32>
    %38 = arith.addf %28, %37 : vector<256x128xf32>
    %c256_i32_22 = arith.constant 256 : i32
    %39 = arith.muli %arg1, %c256_i32_22 : i32
    %c64_i32 = arith.constant 64 : i32
    %40 = arith.addi %39, %c64_i32 : i32
    %41 = tpu.assume_multiple %40, 8 : i32
    %c0_23 = arith.constant 0 : index
    %42 = arith.index_cast %41 : i32 to index
    %c0_24 = arith.constant 0 : index
    %43 = vector.load %arg2[%c0_23, %42, %c0_24] : memref<1x320x128xf32, #tpu.memory_space<vmem>>, vector<1x256x128xf32>
    %44 = vector.shape_cast %43 : vector<1x256x128xf32> to vector<256x128xf32>
    %c4 = arith.constant 4 : index
    %c0_25 = arith.constant 0 : index
    %c0_26 = arith.constant 0 : index
    %45 = vector.load %arg3[%c4, %c0_25, %c0_26] : memref<5x128x128xf32, #tpu.memory_space<vmem>>, vector<1x128x128xf32>
    %46 = vector.shape_cast %45 : vector<1x128x128xf32> to vector<128x128xf32>
    %cst_27 = arith.constant dense<0.000000e+00> : vector<256x128xf32>
    %47 = tpu.matmul %44, %46, %cst_27 {dimension_numbers = #tpu.dot_dimension_numbers<[1], [0], [0], [1], [0, 0, 1, 1], [], []>} : vector<256x128xf32>, vector<128x128xf32>, vector<256x128xf32> -> vector<256x128xf32>
    %48 = arith.addf %38, %47 : vector<256x128xf32>
    %c0_28 = arith.constant 0 : index
    %c0_29 = arith.constant 0 : index
    %49 = vector.load %arg4[%c0_28, %c0_29] : memref<1x128xf32, #tpu.memory_space<vmem>>, vector<1x128xf32>
    %50 = vector.broadcast %49 : vector<1x128xf32> to vector<256x128xf32>
    %51 = arith.addf %48, %50 : vector<256x128xf32>
    %c0_30 = arith.constant 0 : index
    %c0_31 = arith.constant 0 : index
    %c0_32 = arith.constant 0 : index
    %52 = vector.load %arg5[%c0_30, %c0_31, %c0_32] : memref<1x256x1xf32, #tpu.memory_space<vmem>>, vector<1x256x1xf32>
    %53 = vector.shape_cast %52 : vector<1x256x1xf32> to vector<256x1xf32>
    %54 = vector.broadcast %53 : vector<256x1xf32> to vector<256x128xf32>
    %55 = arith.mulf %51, %54 : vector<256x128xf32>
    %c0_33 = arith.constant 0 : index
    %c0_34 = arith.constant 0 : index
    %c0_35 = arith.constant 0 : index
    %56 = vector.load %arg6[%c0_33, %c0_34, %c0_35] : memref<1x256x128xf32, #tpu.memory_space<vmem>>, vector<1x256x128xf32>
    %57 = vector.shape_cast %56 : vector<1x256x128xf32> to vector<256x128xf32>
    %58 = vector.shape_cast %55 : vector<256x128xf32> to vector<1x256x128xf32>
    tpu.vector_store %arg6[%c0_33, %c0_34, %c0_35], %58 {strides = array<i32>} : memref<1x256x128xf32, #tpu.memory_space<vmem>>, vector<1x256x128xf32>,
    return
  }
  func.func @transform_0(%arg0: i32, %arg1: i32) -> (i32, i32, i32) {
    %c0_i32 = arith.constant 0 : i32
    %c0_i32_0 = arith.constant 0 : i32
    %c0_i32_1 = arith.constant 0 : i32
    return %arg0, %c0_i32, %c0_i32_0 : i32, i32, i32
  }
  func.func @transform_1(%arg0: i32, %arg1: i32) -> (i32, i32, i32) {
    %c0_i32 = arith.constant 0 : i32
    %c0_i32_0 = arith.constant 0 : i32
    %c0_i32_1 = arith.constant 0 : i32
    %c0_i32_2 = arith.constant 0 : i32
    return %c0_i32, %c0_i32_0, %c0_i32_1 : i32, i32, i32
  }
  func.func @transform_2(%arg0: i32, %arg1: i32) -> (i32, i32) {
    %c0_i32 = arith.constant 0 : i32
    %c0_i32_0 = arith.constant 0 : i32
    %c0_i32_1 = arith.constant 0 : i32
    return %c0_i32, %c0_i32_0 : i32, i32
  }
  func.func @transform_3(%arg0: i32, %arg1: i32) -> (i32, i32, i32) {
    %c0_i32 = arith.constant 0 : i32
    %c0_i32_0 = arith.constant 0 : i32
    return %arg0, %arg1, %c0_i32 : i32, i32, i32
  }
  func.func @transform_4(%arg0: i32, %arg1: i32) -> (i32, i32, i32) {
    %c0_i32 = arith.constant 0 : i32
    %c0_i32_0 = arith.constant 0 : i32
    return %arg0, %arg1, %c0_i32 : i32, i32, i32
  }
}

</mosaic_0001>

<llo_original>
// kernel: tpu_custom_call.1
$region0: #{tpu_custom_call.1}
  #allocation0 [shape = 'u32[]', space=smem, size = 0x4, offset = 0x4, fixed_abs, tag = 'smem constant byte address 0x4 - core index']
  #allocation1 [shape = 'u32[144,128]{1,0:T(1,128)}', space=vmem, size = 0x12000, scoped, tag = 'internal scratch']
  %s0 = inlined_call_operand.hbm [shape: f32[2,320,128], index: 0, kind: input, shape index: {}]
  %s1 = inlined_call_operand.hbm [shape: f32[5,128,128], index: 1, kind: input, shape index: {}]
  %s2 = inlined_call_operand.hbm [shape: f32[1,128], index: 2, kind: input, shape index: {}]
  %s3 = inlined_call_operand.hbm [shape: f32[2,256,1], index: 3, kind: input, shape index: {}]
  %s4 = inlined_call_operand.hbm [shape: f32[2,256,128], index: 4, kind: output, shape index: {}]
  %s5 = sld [smem:[#allocation0]]
  $region65: #{tpu_custom_call.1} parent=0
    _
  %s7 = ssub.s32 1, %s5
  %s8 = scalar_select 0, %s7, %s5
  $region1: #{tpu_custom_call.1} parent=0
    #allocation2 [shape = 'u8[327680]{0}', space=vmem, size = 0x50000, scoped, tag = 'input window, operand 0']
    #allocation3 [shape = 's32[2]{0}', space=sflag, size = 0x8, scoped, tag = 'scoped memory for tpu_custom_call.1']
    #allocation4 [shape = 's32[2]{0}', space=sflag, size = 0x8, scoped, tag = 'scoped memory for tpu_custom_call.1']
    #allocation5 [shape = 'u8[327680]{0}', space=vmem, size = 0x50000, scoped, tag = 'input window, operand 1, single buffered']
    #allocation6 [shape = 's32[1]{0}', space=sflag, size = 0x4, scoped, tag = 'scoped memory for tpu_custom_call.1']
    #allocation7 [shape = 'u8[512]{0}', space=vmem, size = 0x400, scoped, tag = 'input window, operand 2, single buffered']
    #allocation8 [shape = 'u8[262144]{0}', space=vmem, size = 0x40000, scoped, tag = 'input window, operand 3']
    #allocation9 [shape = 's32[2]{0}', space=sflag, size = 0x8, scoped, tag = 'scoped memory for tpu_custom_call.1']
    #allocation10 [shape = 'u8[262144]{0}', space=vmem, size = 0x40000, scoped, tag = 'output window, operand 0']
    %9 = vsyncpa [#allocation3], 0
    %s10 = scalar_lea.sflag [#allocation3], 1
    %11 = vsyncpa %s10, 0
    %12 = vsyncpa [#allocation6], 0
    %13 = vsyncpa [#allocation9], 0
    %s14 = scalar_lea.sflag [#allocation9], 1
    %15 = vsyncpa %s14, 0
    %16 = vsyncpa [#allocation4], 0
    %s17 = scalar_lea.sflag [#allocation4], 1
    %18 = vsyncpa %s17, 0
    loop: start=0, step=1, limit=4
    $region2: #{tpu_custom_call.1} parent=1 // loop_pre_header
      _
    $region3: #{tpu_custom_call.1} parent=1 // loop_header
      %s20 = sphi 0, %s24
      %p21 = scmp.ge.s32.totalorder %s20, 4
      %s27 = sphi 0, %s39
      %s28 = sphi 0, %s35
      %s29 = sphi 0, %s27
      %s30 = sphi 0, %s28
      %s31 = sphi 0, %s29
      %s32 = sphi 0, %s30
      %s42 = sphi 0, %s44
      %s45 = sphi 0, %s42
      %s46 = sphi 0, %s45
      %s62 = sphi 0, %s46
      %s66 = sphi 0, %s66
      %s68 = sphi 0, %s66
      %s69 = sphi 0, %s68
      %s83 = sphi 0, %s69
      %s87 = sphi 0, %s87
      %s89 = sphi 0, %s87
      %s90 = sphi 0, %s89
      %s104 = sphi 0, %s90
      %s112 = sphi 0, %s114
      %s115 = sphi 0, %s112
      %s116 = sphi 0, %s115
      %s132 = sphi 0, %s116
      %s140 = sphi 0, %s142
      %s143 = sphi 0, %s140
      %s144 = sphi 0, %s143
      %s160 = sphi 0, %s144
    $region4: #{tpu_custom_call.1} parent=1 // loop_header_branch
      %23 = sbr.rel (%p21) target = $region8
    $region5: #{tpu_custom_call.1} parent=1 // loop_body
      %s25 = ssub.s32 %s20, 1
      %s26 = ssub.s32 %s20, 2
      %s33 = sadd.s32 1, %s28
      %p34 = scmp.ge.s32.totalorder %s33, 1
      %s35 = scalar_select %p34, 0, %s33
      %s36 = sadd.s32 1, %s27
      %s37 = scalar_select %p34, %s36, %s27
      %p38 = scmp.ge.s32.totalorder %s37, 2
      %s39 = scalar_select %p38, 0, %s37
      %s40 = ssub.s32 %s27, %s39
      %p41 = scmp.eq.s32.totalorder %s40, 0
      %s43 = sadd.s32 %s42, 1
      %s44 = scalar_select %p41, %s42, %s43
      %p47 = pneg %p41
      %p48 = scmp.eq.s32.totalorder %s20, 1
      %p49 = por %p47, %p48
      %p50 = scmp.ne.s32.totalorder %s42, %s45
      %p51 = scmp.eq.s32.totalorder %s20, 0
      %p52 = por %p50, %p51
      %p53 = scmp.ne.s32.totalorder %s42, %s45
      %p54 = scmp.eq.s32.totalorder %s25, 1
      %p55 = por %p53, %p54
      %p56 = scmp.ne.s32.totalorder %s45, %s46
      %p57 = scmp.eq.s32.totalorder %s25, 0
      %p58 = por %p56, %p57
      %p59 = scmp.ne.s32.totalorder %s45, %s46
      %p60 = scmp.eq.s32.totalorder %s26, 1
      %p61 = por %p59, %p60
      %p63 = scmp.ne.s32.totalorder %s46, %s62
      %p64 = scmp.eq.s32.totalorder %s26, 0
      %p65 = por %p63, %p64
      %s67 = sadd.s32 %s66, 1
      %p70 = scmp.eq.s32.totalorder %s20, 1
      %p71 = scmp.ne.s32.totalorder %s66, %s68
      %p72 = scmp.eq.s32.totalorder %s20, 0
      %p73 = por %p71, %p72
      %p74 = scmp.ne.s32.totalorder %s66, %s68
      %p75 = scmp.eq.s32.totalorder %s25, 1
      %p76 = por %p74, %p75
      %p77 = scmp.ne.s32.totalorder %s68, %s69
      %p78 = scmp.eq.s32.totalorder %s25, 0
      %p79 = por %p77, %p78
      %p80 = scmp.ne.s32.totalorder %s68, %s69
      %p81 = scmp.eq.s32.totalorder %s26, 1
      %p82 = por %p80, %p81
      %p84 = scmp.ne.s32.totalorder %s69, %s83
      %p85 = scmp.eq.s32.totalorder %s26, 0
      %p86 = por %p84, %p85
      %s88 = sadd.s32 %s87, 1
      %p91 = scmp.eq.s32.totalorder %s20, 1
      %p92 = scmp.ne.s32.totalorder %s87, %s89
      %p93 = scmp.eq.s32.totalorder %s20, 0
      %p94 = por %p92, %p93
      %p95 = scmp.ne.s32.totalorder %s87, %s89
      %p96 = scmp.eq.s32.totalorder %s25, 1
      %p97 = por %p95, %p96
      %p98 = scmp.ne.s32.totalorder %s89, %s90
      %p99 = scmp.eq.s32.totalorder %s25, 0
      %p100 = por %p98, %p99
      %p101 = scmp.ne.s32.totalorder %s89, %s90
      %p102 = scmp.eq.s32.totalorder %s26, 1
      %p103 = por %p101, %p102
      %p105 = scmp.ne.s32.totalorder %s90, %s104
      %p106 = scmp.eq.s32.totalorder %s26, 0
      %p107 = por %p105, %p106
      %s108 = ssub.s32 %s27, %s39
      %s109 = ssub.s32 %s28, %s35
      %s110 = sor.u32 %s108, %s109
      %p111 = scmp.eq.s32.totalorder %s110, 0
      %s113 = sadd.s32 %s112, 1
      %s114 = scalar_select %p111, %s112, %s113
      %p117 = pneg %p111
      %p118 = scmp.eq.s32.totalorder %s20, 1
      %p119 = por %p117, %p118
      %p120 = scmp.ne.s32.totalorder %s112, %s115
      %p121 = scmp.eq.s32.totalorder %s20, 0
      %p122 = por %p120, %p121
      %p123 = scmp.ne.s32.totalorder %s112, %s115
      %p124 = scmp.eq.s32.totalorder %s25, 1
      %p125 = por %p123, %p124
      %p126 = scmp.ne.s32.totalorder %s115, %s116
      %p127 = scmp.eq.s32.totalorder %s25, 0
      %p128 = por %p126, %p127
      %p129 = scmp.ne.s32.totalorder %s115, %s116
      %p130 = scmp.eq.s32.totalorder %s26, 1
      %p131 = por %p129, %p130
      %p133 = scmp.ne.s32.totalorder %s116, %s132
      %p134 = scmp.eq.s32.totalorder %s26, 0
      %p135 = por %p133, %p134
      %s136 = ssub.s32 %s27, %s39
      %s137 = ssub.s32 %s28, %s35
      %s138 = sor.u32 %s136, %s137
      %p139 = scmp.eq.s32.totalorder %s138, 0
      %s141 = sadd.s32 %s140, 1
      %s142 = scalar_select %p139, %s140, %s141
      %p145 = pneg %p139
      %p146 = scmp.eq.s32.totalorder %s20, 1
      %p147 = por %p145, %p146
      %p148 = scmp.ne.s32.totalorder %s140, %s143
      %p149 = scmp.eq.s32.totalorder %s20, 0
      %p150 = por %p148, %p149
      %p151 = scmp.ne.s32.totalorder %s140, %s143
      %p152 = scmp.eq.s32.totalorder %s25, 1
      %p153 = por %p151, %p152
      %p154 = scmp.ne.s32.totalorder %s143, %s144
      %p155 = scmp.eq.s32.totalorder %s25, 0
      %p156 = por %p154, %p155
      %p157 = scmp.ne.s32.totalorder %s143, %s144
      %p158 = scmp.eq.s32.totalorder %s26, 1
      %p159 = por %p157, %p158
      %p161 = scmp.ne.s32.totalorder %s144, %s160
      %p162 = scmp.eq.s32.totalorder %s26, 0
      %p163 = por %p161, %p162
      %p164 = scmp.le.s32.totalorder 1, %s20
      %p165 = scmp.lt.s32.totalorder %s20, 3
      %p166 = pnand %p164, %p165
      %p167 = pneg %p166
      // Predicated region
      $region9: #{tpu_custom_call.1} parent=5 // pred_check
        _
      $region10: #{tpu_custom_call.1} parent=5 // pred_check_branch
        %169 = sbr.rel (%p166) target = $region12
      $region11: #{tpu_custom_call.1} parent=5 // pred_region
        %s170 = ssub.s32 %s20, 1
        // Predicated region
        $region13: #{tpu_custom_call.1} parent=11 // pred_check
          %p171 = pneg %p79
        $region14: #{tpu_custom_call.1} parent=11 // pred_check_branch
          %173 = sbr.rel (%p171) target = $region16
        $region15: #{tpu_custom_call.1} parent=11 // pred_region
          %s175 = ssub.s32 10240, 10240
          %176 = vsyncadd [#allocation6], %s175
          %s177 = sshll.u32 [#allocation5], 4
          %s178 = int_to_ptr.vmem [resolvable:$true] %s177
          %183 = dma.hbm_to_vmem [thread:$0]  %s1, 10240, %s178, [#allocation6], 128, 128, 8
        $region16: #{tpu_custom_call.1} parent=11 // pred_fallthru
          _
        // Predicated region
        $region17: #{tpu_custom_call.1} parent=11 // pred_check
          %p184 = pneg %p100
        $region18: #{tpu_custom_call.1} parent=11 // pred_check_branch
          %186 = sbr.rel (%p184) target = $region20
        $region19: #{tpu_custom_call.1} parent=11 // pred_region
          %s188 = ssub.s32 16, 16
          %189 = vsyncadd [#allocation6], %s188
          %s191 = sshll.u32 [#allocation7], 4
          %s192 = int_to_ptr.vmem [resolvable:$true] %s191
          %194 = dma.hbm_to_vmem [thread:$0]  %s2, 16, %s192, [#allocation6]
        $region20: #{tpu_custom_call.1} parent=11 // pred_fallthru
          _
      $region12: #{tpu_custom_call.1} parent=5 // pred_fallthru
        _
      %p195 = scmp.lt.s32.totalorder %s20, 2
      // Predicated region
      $region21: #{tpu_custom_call.1} parent=5 // pred_check
        %p196 = pneg %p195
      $region22: #{tpu_custom_call.1} parent=5 // pred_check_branch
        %198 = sbr.rel (%p196) target = $region24
      $region23: #{tpu_custom_call.1} parent=5 // pred_region
        // Predicated region
        $region25: #{tpu_custom_call.1} parent=23 // pred_check
          %p199 = pneg %p52
        $region26: #{tpu_custom_call.1} parent=23 // pred_check_branch
          %201 = sbr.rel (%p199) target = $region28
        $region27: #{tpu_custom_call.1} parent=23 // pred_region
          %s202 = sand.u32 %s42, 1
          %s203 = scalar_lea.sflag [#allocation3], %s202
          %s204 = sand.u32 %s42, 1
          %s205 = smul.addr %s204, 320
          %s206 = scalar_lea.vmem [#allocation2], %s205
          %s208 = ssub.s32 5120, 5120
          %209 = vsyncadd %s203, %s208
          %s210 = smul.addr %s27, 40
          %s211 = smul.addr %s210, 128
          %s212 = scalar_lea.hbm %s0, %s211
          %s213 = sshll.u32 %s206, 4
          %s214 = int_to_ptr.vmem [resolvable:$true] %s213
          %219 = dma.hbm_to_vmem [thread:$0]  %s212, 5120, %s214, %s203, 128, 128, 8
        $region28: #{tpu_custom_call.1} parent=23 // pred_fallthru
          _
        // Predicated region
        $region29: #{tpu_custom_call.1} parent=23 // pred_check
          %p220 = pneg %p122
        $region30: #{tpu_custom_call.1} parent=23 // pred_check_branch
          %222 = sbr.rel (%p220) target = $region32
        $region31: #{tpu_custom_call.1} parent=23 // pred_region
          %s223 = sand.u32 %s112, 1
          %s224 = scalar_lea.sflag [#allocation9], %s223
          %s225 = sand.u32 %s112, 1
          %s226 = smul.addr %s225, 256
          %s227 = scalar_lea.vmem [#allocation8], %s226
          %s228 = smul.u32 32, %s28
          %s230 = ssub.s32 4096, 4096
          %231 = vsyncadd %s224, %s230
          %s232 = smul.addr %s27, 32
          %s233 = sadd.s32 %s228, %s232
          %s234 = smul.addr %s233, 128
          %s235 = scalar_lea.hbm %s3, %s234
          %s236 = sshll.u32 %s227, 4
          %s237 = int_to_ptr.vmem [resolvable:$true] %s236
          %242 = dma.hbm_to_vmem [thread:$0]  %s235, 4096, %s237, %s224, 128, 128, 8
        $region32: #{tpu_custom_call.1} parent=23 // pred_fallthru
          _
      $region24: #{tpu_custom_call.1} parent=5 // pred_fallthru
        _
      %p243 = scmp.le.s32.totalorder 1, %s20
      %p244 = scmp.lt.s32.totalorder %s20, 3
      %p245 = pnand %p243, %p244
      %p246 = pneg %p245
      // Predicated region
      $region33: #{tpu_custom_call.1} parent=5 // pred_check
        _
      $region34: #{tpu_custom_call.1} parent=5 // pred_check_branch
        %248 = sbr.rel (%p245) target = $region36
      $region35: #{tpu_custom_call.1} parent=5 // pred_region
        %s249 = ssub.s32 %s20, 1
        %s250 = sand.u32 %s45, 1
        %s251 = scalar_lea.sflag [#allocation3], %s250
        %s252 = sand.u32 %s45, 1
        %s253 = smul.addr %s252, 320
        %s254 = scalar_lea.vmem [#allocation2], %s253
        // Predicated region
        $region37: #{tpu_custom_call.1} parent=35 // pred_check
          %p255 = pneg %p58
        $region38: #{tpu_custom_call.1} parent=35 // pred_check_branch
          %257 = sbr.rel (%p255) target = $region40
        $region39: #{tpu_custom_call.1} parent=35 // pred_region
          %258 = dma.done %s251, 5120
        $region40: #{tpu_custom_call.1} parent=35 // pred_fallthru
          _
        // Predicated region
        $region41: #{tpu_custom_call.1} parent=35 // pred_check
          %p259 = pneg %p79
        $region42: #{tpu_custom_call.1} parent=35 // pred_check_branch
          %261 = sbr.rel (%p259) target = $region44
        $region43: #{tpu_custom_call.1} parent=35 // pred_region
          %262 = dma.done [#allocation6], 10240
        $region44: #{tpu_custom_call.1} parent=35 // pred_fallthru
          _
        // Predicated region
        $region45: #{tpu_custom_call.1} parent=35 // pred_check
          %p263 = pneg %p100
        $region46: #{tpu_custom_call.1} parent=35 // pred_check_branch
          %265 = sbr.rel (%p263) target = $region48
        $region47: #{tpu_custom_call.1} parent=35 // pred_region
          %266 = dma.done [#allocation6], 16
        $region48: #{tpu_custom_call.1} parent=35 // pred_fallthru
          _
        %s267 = sand.u32 %s115, 1
        %s268 = scalar_lea.sflag [#allocation9], %s267
        %s269 = sand.u32 %s115, 1
        %s270 = smul.addr %s269, 256
        %s271 = scalar_lea.vmem [#allocation8], %s270
        // Predicated region
        $region49: #{tpu_custom_call.1} parent=35 // pred_check
          %p272 = pneg %p128
        $region50: #{tpu_custom_call.1} parent=35 // pred_check_branch
          %274 = sbr.rel (%p272) target = $region52
        $region51: #{tpu_custom_call.1} parent=35 // pred_region
          %275 = dma.done %s268, 4096
        $region52: #{tpu_custom_call.1} parent=35 // pred_fallthru
          _
        %s276 = sand.u32 %s45, 1
        %s277 = scalar_lea.sflag [#allocation3], %s276
        %s278 = sand.u32 %s45, 1
        %s279 = smul.addr %s278, 320
        %s280 = scalar_lea.vmem [#allocation2], %s279
        %p281 = pneg %p58
        %p282 = pneg %p55
        %p283 = pneg %p79
        %p284 = pneg %p76
        %p285 = pneg %p100
        %p286 = pneg %p97
        %s287 = sand.u32 %s115, 1
        %s288 = scalar_lea.sflag [#allocation9], %s287
        %s289 = sand.u32 %s115, 1
        %s290 = smul.addr %s289, 256
        %s291 = scalar_lea.vmem [#allocation8], %s290
        %p292 = pneg %p128
        %p293 = pneg %p125
        %p294 = pneg %p156
        %p295 = pneg %p153
        %s296 = sand.u32 %s143, 1
        %s297 = scalar_lea.sflag [#allocation4], %s296
        %s298 = sand.u32 %s143, 1
        %s299 = smul.addr %s298, 256
        %s300 = scalar_lea.vmem [#allocation10], %s299
        %s301 = smul.u32 32, %s30
        %s302 = smul.u32 32, %s30
        %s303 = smul.u32 %s30, 256
        %s304 = scalar_lea.vmem %s254, %s303 [#allocation2]
        %v305 = vld [vmem:[%s304] sm:$0xff]
        %v306 = vld [vmem:[%s304 + $0x8] sm:$0xff]
        %v307 = vld [vmem:[%s304 + $0x10] sm:$0xff]
        %v308 = vld [vmem:[%s304 + $0x18] sm:$0xff]
        %v309 = vld [vmem:[%s304 + $0x20] sm:$0xff]
        %v310 = vld [vmem:[%s304 + $0x28] sm:$0xff]
        %v311 = vld [vmem:[%s304 + $0x30] sm:$0xff]
        %v312 = vld [vmem:[%s304 + $0x38] sm:$0xff]
        %v313 = vld [vmem:[%s304 + $0x40] sm:$0xff]
        %v314 = vld [vmem:[%s304 + $0x48] sm:$0xff]
        %v315 = vld [vmem:[%s304 + $0x50] sm:$0xff]
        %v316 = vld [vmem:[%s304 + $0x58] sm:$0xff]
        %v317 = vld [vmem:[%s304 + $0x60] sm:$0xff]
        %v318 = vld [vmem:[%s304 + $0x68] sm:$0xff]
        %v319 = vld [vmem:[%s304 + $0x70] sm:$0xff]
        %v320 = vld [vmem:[%s304 + $0x78] sm:$0xff]
        %v321 = vld [vmem:[%s304 + $0x80] sm:$0xff]
        %v322 = vld [vmem:[%s304 + $0x88] sm:$0xff]
        %v323 = vld [vmem:[%s304 + $0x90] sm:$0xff]
        %v324 = vld [vmem:[%s304 + $0x98] sm:$0xff]
        %v325 = vld [vmem:[%s304 + $0xa0] sm:$0xff]
        %v326 = vld [vmem:[%s304 + $0xa8] sm:$0xff]
        %v327 = vld [vmem:[%s304 + $0xb0] sm:$0xff]
        %v328 = vld [vmem:[%s304 + $0xb8] sm:$0xff]
        %v329 = vld [vmem:[%s304 + $0xc0] sm:$0xff]
        %v330 = vld [vmem:[%s304 + $0xc8] sm:$0xff]
        %v331 = vld [vmem:[%s304 + $0xd0] sm:$0xff]
        %v332 = vld [vmem:[%s304 + $0xd8] sm:$0xff]
        %v333 = vld [vmem:[%s304 + $0xe0] sm:$0xff]
        %v334 = vld [vmem:[%s304 + $0xe8] sm:$0xff]
        %v335 = vld [vmem:[%s304 + $0xf0] sm:$0xff]
        %v336 = vld [vmem:[%s304 + $0xf8] sm:$0xff]
        %v337 = vld [vmem:[#allocation5] sm:$0xff]
        %v338 = vld [vmem:[#allocation5 + $0x8] sm:$0xff]
        %v339 = vld [vmem:[#allocation5 + $0x10] sm:$0xff]
        %v340 = vld [vmem:[#allocation5 + $0x18] sm:$0xff]
        %v341 = vld [vmem:[#allocation5 + $0x20] sm:$0xff]
        %v342 = vld [vmem:[#allocation5 + $0x28] sm:$0xff]
        %v343 = vld [vmem:[#allocation5 + $0x30] sm:$0xff]
        %v344 = vld [vmem:[#allocation5 + $0x38] sm:$0xff]
        %v345 = vld [vmem:[#allocation5 + $0x40] sm:$0xff]
        %v346 = vld [vmem:[#allocation5 + $0x48] sm:$0xff]
        %v347 = vld [vmem:[#allocation5 + $0x50] sm:$0xff]
        %v348 = vld [vmem:[#allocation5 + $0x58] sm:$0xff]
        %v349 = vld [vmem:[#allocation5 + $0x60] sm:$0xff]
        %v350 = vld [vmem:[#allocation5 + $0x68] sm:$0xff]
        %v351 = vld [vmem:[#allocation5 + $0x70] sm:$0xff]
        %v352 = vld [vmem:[#allocation5 + $0x78] sm:$0xff]
        %s353 = sadd.s32 %s303, 16
        %s354 = scalar_lea.vmem %s254, %s353 [#allocation2]
        %v355 = vld [vmem:[%s354] sm:$0xff]
        %v356 = vld [vmem:[%s354 + $0x8] sm:$0xff]
        %v357 = vld [vmem:[%s354 + $0x10] sm:$0xff]
        %v358 = vld [vmem:[%s354 + $0x18] sm:$0xff]
        %v359 = vld [vmem:[%s354 + $0x20] sm:$0xff]
        %v360 = vld [vmem:[%s354 + $0x28] sm:$0xff]
        %v361 = vld [vmem:[%s354 + $0x30] sm:$0xff]
        %v362 = vld [vmem:[%s354 + $0x38] sm:$0xff]
        %v363 = vld [vmem:[%s354 + $0x40] sm:$0xff]
        %v364 = vld [vmem:[%s354 + $0x48] sm:$0xff]
        %v365 = vld [vmem:[%s354 + $0x50] sm:$0xff]
        %v366 = vld [vmem:[%s354 + $0x58] sm:$0xff]
        %v367 = vld [vmem:[%s354 + $0x60] sm:$0xff]
        %v368 = vld [vmem:[%s354 + $0x68] sm:$0xff]
        %v369 = vld [vmem:[%s354 + $0x70] sm:$0xff]
        %v370 = vld [vmem:[%s354 + $0x78] sm:$0xff]
        %v371 = vld [vmem:[%s354 + $0x80] sm:$0xff]
        %v372 = vld [vmem:[%s354 + $0x88] sm:$0xff]
        %v373 = vld [vmem:[%s354 + $0x90] sm:$0xff]
        %v374 = vld [vmem:[%s354 + $0x98] sm:$0xff]
        %v375 = vld [vmem:[%s354 + $0xa0] sm:$0xff]
        %v376 = vld [vmem:[%s354 + $0xa8] sm:$0xff]
        %v377 = vld [vmem:[%s354 + $0xb0] sm:$0xff]
        %v378 = vld [vmem:[%s354 + $0xb8] sm:$0xff]
        %v379 = vld [vmem:[%s354 + $0xc0] sm:$0xff]
        %v380 = vld [vmem:[%s354 + $0xc8] sm:$0xff]
        %v381 = vld [vmem:[%s354 + $0xd0] sm:$0xff]
        %v382 = vld [vmem:[%s354 + $0xd8] sm:$0xff]
        %v383 = vld [vmem:[%s354 + $0xe0] sm:$0xff]
        %v384 = vld [vmem:[%s354 + $0xe8] sm:$0xff]
        %v385 = vld [vmem:[%s354 + $0xf0] sm:$0xff]
        %v386 = vld [vmem:[%s354 + $0xf8] sm:$0xff]
        %s387 = scalar_lea.vmem [#allocation5], 128
        %v388 = vld [vmem:[%s387] sm:$0xff]
        %v389 = vld [vmem:[%s387 + $0x8] sm:$0xff]
        %v390 = vld [vmem:[%s387 + $0x10] sm:$0xff]
        %v391 = vld [vmem:[%s387 + $0x18] sm:$0xff]
        %v392 = vld [vmem:[%s387 + $0x20] sm:$0xff]
        %v393 = vld [vmem:[%s387 + $0x28] sm:$0xff]
        %v394 = vld [vmem:[%s387 + $0x30] sm:$0xff]
        %v395 = vld [vmem:[%s387 + $0x38] sm:$0xff]
        %v396 = vld [vmem:[%s387 + $0x40] sm:$0xff]
        %v397 = vld [vmem:[%s387 + $0x48] sm:$0xff]
        %v398 = vld [vmem:[%s387 + $0x50] sm:$0xff]
        %v399 = vld [vmem:[%s387 + $0x58] sm:$0xff]
        %v400 = vld [vmem:[%s387 + $0x60] sm:$0xff]
        %v401 = vld [vmem:[%s387 + $0x68] sm:$0xff]
        %v402 = vld [vmem:[%s387 + $0x70] sm:$0xff]
        %v403 = vld [vmem:[%s387 + $0x78] sm:$0xff]
        %404 = vmatprep.subr.mxu0 0.0
        %405 = vmatpush1.msra.mxu0 %v388
        %406 = vmatprep.subr.mxu0 0.0
        %407 = vmatpush1.msra.mxu0 %v389
        %408 = vmatprep.subr.mxu0 0.0
        %409 = vmatpush1.msra.mxu0 %v390
        %410 = vmatprep.subr.mxu0 0.0
        %411 = vmatpush1.msra.mxu0 %v391
        %412 = vmatprep.subr.mxu0 0.0
        %413 = vmatpush1.msra.mxu0 %v392
        %414 = vmatprep.subr.mxu0 0.0
        %415 = vmatpush1.msra.mxu0 %v393
        %416 = vmatprep.subr.mxu0 0.0
        %417 = vmatpush1.msra.mxu0 %v394
        %418 = vmatprep.subr.mxu0 0.0
        %419 = vmatpush1.msra.mxu0 %v395
        %420 = vmatprep.subr.mxu0 0.0
        %421 = vmatpush1.msra.mxu0 %v396
        %422 = vmatprep.subr.mxu0 0.0
        %423 = vmatpush1.msra.mxu0 %v397
        %424 = vmatprep.subr.mxu0 0.0
        %425 = vmatpush1.msra.mxu0 %v398
        %426 = vmatprep.subr.mxu0 0.0
        %427 = vmatpush1.msra.mxu0 %v399
        %428 = vmatprep.subr.mxu0 0.0
        %429 = vmatpush1.msra.mxu0 %v400
        %430 = vmatprep.subr.mxu0 0.0
        %431 = vmatpush1.msra.mxu0 %v401
        %432 = vmatprep.subr.mxu0 0.0
        %433 = vmatpush1.msra.mxu0 %v402
        %434 = vmatprep.subr.mxu0 0.0
        %435 = vmatpush1.msra.mxu0 %v403
        %436 = vmatprep.subr.mxu0 0.0
        %437 = vmatpush1.msra.mxu0 0.0
        %438 = vmatprep.subr.mxu0 0.0
        %439 = vmatpush1.msra.mxu0 0.0
        %440 = vmatprep.subr.mxu0 0.0
        %441 = vmatpush1.msra.mxu0 0.0
        %442 = vmatprep.subr.mxu0 0.0
        %443 = vmatpush1.msra.mxu0 0.0
        %444 = vmatprep.subr.mxu0 0.0
        %445 = vmatpush1.msra.mxu0 0.0
        %446 = vmatprep.subr.mxu0 0.0
        %447 = vmatpush1.msra.mxu0 0.0
        %448 = vmatprep.subr.mxu0 0.0
        %449 = vmatpush1.msra.mxu0 0.0
        %450 = vmatprep.subr.mxu0 0.0
        %451 = vmatpush1.msra.mxu0 0.0
        %452 = vmatprep.subr.mxu0 0.0
        %453 = vmatpush1.msra.mxu0 0.0
        %454 = vmatprep.subr.mxu0 0.0
        %455 = vmatpush1.msra.mxu0 0.0
        %456 = vmatprep.subr.mxu0 0.0
        %457 = vmatpush1.msra.mxu0 0.0
        %458 = vmatprep.subr.mxu0 0.0
        %459 = vmatpush1.msra.mxu0 0.0
        %460 = vmatprep.subr.mxu0 0.0
        %461 = vmatpush1.msra.mxu0 0.0
        %462 = vmatprep.subr.mxu0 0.0
        %463 = vmatpush1.msra.mxu0 0.0
        %464 = vmatprep.subr.mxu0 0.0
        %465 = vmatpush1.msra.mxu0 0.0
        %466 = vmatprep.subr.mxu0 0.0
        %467 = vmatpush1.msra.mxu0 0.0
        %468 = vmatprep.mubr.f32.mxu0 0.0
        %469 = vmatmul.mubr.f32.gmra.mrb[0].mxu0 %v355
        %v470 = vpop.f32.mrb[0].mxu0
        %v471 = vadd.f32 0.0, %v470
        %v472 = vpop.f32.mrb[0].mxu0
        %473 = vmatprep.mubr.f32.mxu0 0.0
        %474 = vmatmul.mubr.f32.gmra.mrb[0].mxu0 %v356
        %v475 = vpop.f32.mrb[0].mxu0
        %v476 = vadd.f32 0.0, %v475
        %v477 = vpop.f32.mrb[0].mxu0
        %478 = vmatprep.mubr.f32.mxu0 0.0
        %479 = vmatmul.mubr.f32.gmra.mrb[0].mxu0 %v357
        %v480 = vpop.f32.mrb[0].mxu0
        %v481 = vadd.f32 0.0, %v480
        %v482 = vpop.f32.mrb[0].mxu0
        %483 = vmatprep.mubr.f32.mxu0 0.0
        %484 = vmatmul.mubr.f32.gmra.mrb[0].mxu0 %v358
        %v485 = vpop.f32.mrb[0].mxu0
        %v486 = vadd.f32 0.0, %v485
        %v487 = vpop.f32.mrb[0].mxu0
        %488 = vmatprep.mubr.f32.mxu0 0.0
        %489 = vmatmul.mubr.f32.gmra.mrb[0].mxu0 %v359
        %v490 = vpop.f32.mrb[0].mxu0
        %v491 = vadd.f32 0.0, %v490
        %v492 = vpop.f32.mrb[0].mxu0
        %493 = vmatprep.mubr.f32.mxu0 0.0
        %494 = vmatmul.mubr.f32.gmra.mrb[0].mxu0 %v360
        %v495 = vpop.f32.mrb[0].mxu0
        %v496 = vadd.f32 0.0, %v495
        %v497 = vpop.f32.mrb[0].mxu0
        %498 = vmatprep.mubr.f32.mxu0 0.0
        %499 = vmatmul.mubr.f32.gmra.mrb[0].mxu0 %v361
        %v500 = vpop.f32.mrb[0].mxu0
        %v501 = vadd.f32 0.0, %v500
        %v502 = vpop.f32.mrb[0].mxu0
        %503 = vmatprep.mubr.f32.mxu0 0.0
        %504 = vmatmul.mubr.f32.gmra.mrb[0].mxu0 %v362
        %v505 = vpop.f32.mrb[0].mxu0
        %v506 = vadd.f32 0.0, %v505
        %v507 = vpop.f32.mrb[0].mxu0
        %508 = vmatprep.mubr.f32.mxu0 0.0
        %509 = vmatmul.mubr.f32.gmra.mrb[0].mxu0 %v363
        %v510 = vpop.f32.mrb[0].mxu0
        %v511 = vadd.f32 0.0, %v510
        %v512 = vpop.f32.mrb[0].mxu0
        %513 = vmatprep.mubr.f32.mxu0 0.0
        %514 = vmatmul.mubr.f32.gmra.mrb[0].mxu0 %v364
        %v515 = vpop.f32.mrb[0].mxu0
        %v516 = vadd.f32 0.0, %v515
        %v517 = vpop.f32.mrb[0].mxu0
        %518 = vmatprep.mubr.f32.mxu0 0.0
        %519 = vmatmul.mubr.f32.gmra.mrb[0].mxu0 %v365
        %v520 = vpop.f32.mrb[0].mxu0
        %v521 = vadd.f32 0.0, %v520
        %v522 = vpop.f32.mrb[0].mxu0
        %523 = vmatprep.mubr.f32.mxu0 0.0
        %524 = vmatmul.mubr.f32.gmra.mrb[0].mxu0 %v366
        %v525 = vpop.f32.mrb[0].mxu0
        %v526 = vadd.f32 0.0, %v525
        %v527 = vpop.f32.mrb[0].mxu0
        %528 = vmatprep.mubr.f32.mxu0 0.0
        %529 = vmatmul.mubr.f32.gmra.mrb[0].mxu0 %v367
        %v530 = vpop.f32.mrb[0].mxu0
        %v531 = vadd.f32 0.0, %v530
        %v532 = vpop.f32.mrb[0].mxu0
        %533 = vmatprep.mubr.f32.mxu0 0.0
        %534 = vmatmul.mubr.f32.gmra.mrb[0].mxu0 %v368
        %v535 = vpop.f32.mrb[0].mxu0
        %v536 = vadd.f32 0.0, %v535
        %v537 = vpop.f32.mrb[0].mxu0
        %538 = vmatprep.mubr.f32.mxu0 0.0
        %539 = vmatmul.mubr.f32.gmra.mrb[0].mxu0 %v369
        %v540 = vpop.f32.mrb[0].mxu0
        %v541 = vadd.f32 0.0, %v540
        %v542 = vpop.f32.mrb[0].mxu0
        %543 = vmatprep.mubr.f32.mxu0 0.0
        %544 = vmatmul.mubr.f32.gmra.mrb[0].mxu0 %v370
        %v545 = vpop.f32.mrb[0].mxu0
        %v546 = vadd.f32 0.0, %v545
        %v547 = vpop.f32.mrb[0].mxu0
        %548 = vmatprep.mubr.f32.mxu0 0.0
        %549 = vmatmul.mubr.f32.gmra.mrb[0].mxu0 %v371
        %v550 = vpop.f32.mrb[0].mxu0
        %v551 = vadd.f32 0.0, %v550
        %v552 = vpop.f32.mrb[0].mxu0
        %553 = vmatprep.mubr.f32.mxu0 0.0
        %554 = vmatmul.mubr.f32.gmra.mrb[0].mxu0 %v372
        %v555 = vpop.f32.mrb[0].mxu0
        %v556 = vadd.f32 0.0, %v555
        %v557 = vpop.f32.mrb[0].mxu0
        %558 = vmatprep.mubr.f32.mxu0 0.0
        %559 = vmatmul.mubr.f32.gmra.mrb[0].mxu0 %v373
        %v560 = vpop.f32.mrb[0].mxu0
        %v561 = vadd.f32 0.0, %v560
        %v562 = vpop.f32.mrb[0].mxu0
        %563 = vmatprep.mubr.f32.mxu0 0.0
        %564 = vmatmul.mubr.f32.gmra.mrb[0].mxu0 %v374
        %v565 = vpop.f32.mrb[0].mxu0
        %v566 = vadd.f32 0.0, %v565
        %v567 = vpop.f32.mrb[0].mxu0
        %568 = vmatprep.mubr.f32.mxu0 0.0
        %569 = vmatmul.mubr.f32.gmra.mrb[0].mxu0 %v375
        %v570 = vpop.f32.mrb[0].mxu0
        %v571 = vadd.f32 0.0, %v570
        %v572 = vpop.f32.mrb[0].mxu0
        %573 = vmatprep.mubr.f32.mxu0 0.0
        %574 = vmatmul.mubr.f32.gmra.mrb[0].mxu0 %v376
        %v575 = vpop.f32.mrb[0].mxu0
        %v576 = vadd.f32 0.0, %v575
        %v577 = vpop.f32.mrb[0].mxu0
        %578 = vmatprep.mubr.f32.mxu0 0.0
        %579 = vmatmul.mubr.f32.gmra.mrb[0].mxu0 %v377
        %v580 = vpop.f32.mrb[0].mxu0
        %v581 = vadd.f32 0.0, %v580
        %v582 = vpop.f32.mrb[0].mxu0
        %583 = vmatprep.mubr.f32.mxu0 0.0
        %584 = vmatmul.mubr.f32.gmra.mrb[0].mxu0 %v378
        %v585 = vpop.f32.mrb[0].mxu0
        %v586 = vadd.f32 0.0, %v585
        %v587 = vpop.f32.mrb[0].mxu0
        %588 = vmatprep.mubr.f32.mxu0 0.0
        %589 = vmatmul.mubr.f32.gmra.mrb[0].mxu0 %v379
        %v590 = vpop.f32.mrb[0].mxu0
        %v591 = vadd.f32 0.0, %v590
        %v592 = vpop.f32.mrb[0].mxu0
        %593 = vmatprep.mubr.f32.mxu0 0.0
        %594 = vmatmul.mubr.f32.gmra.mrb[0].mxu0 %v380
        %v595 = vpop.f32.mrb[0].mxu0
        %v596 = vadd.f32 0.0, %v595
        %v597 = vpop.f32.mrb[0].mxu0
        %598 = vmatprep.mubr.f32.mxu0 0.0
        %599 = vmatmul.mubr.f32.gmra.mrb[0].mxu0 %v381
        %v600 = vpop.f32.mrb[0].mxu0
        %v601 = vadd.f32 0.0, %v600
        %v602 = vpop.f32.mrb[0].mxu0
        %603 = vmatprep.mubr.f32.mxu0 0.0
        %604 = vmatmul.mubr.f32.gmra.mrb[0].mxu0 %v382
        %v605 = vpop.f32.mrb[0].mxu0
        %v606 = vadd.f32 0.0, %v605
        %v607 = vpop.f32.mrb[0].mxu0
        %608 = vmatprep.mubr.f32.mxu0 0.0
        %609 = vmatmul.mubr.f32.gmra.mrb[0].mxu0 %v383
        %v610 = vpop.f32.mrb[0].mxu0
        %v611 = vadd.f32 0.0, %v610
        %v612 = vpop.f32.mrb[0].mxu0
        %613 = vmatprep.mubr.f32.mxu0 0.0
        %614 = vmatmul.mubr.f32.gmra.mrb[0].mxu0 %v384
        %v615 = vpop.f32.mrb[0].mxu0
        %v616 = vadd.f32 0.0, %v615
        %v617 = vpop.f32.mrb[0].mxu0
        %618 = vmatprep.mubr.f32.mxu0 0.0
        %619 = vmatmul.mubr.f32.gmra.mrb[0].mxu0 %v385
        %v620 = vpop.f32.mrb[0].mxu0
        %v621 = vadd.f32 0.0, %v620
        %v622 = vpop.f32.mrb[0].mxu0
        %623 = vmatprep.mubr.f32.mxu0 0.0
        %624 = vmatmul.mubr.f32.gmra.mrb[0].mxu0 %v386
        %v625 = vpop.f32.mrb[0].mxu0
        %v626 = vadd.f32 0.0, %v625
        %v627 = vpop.f32.mrb[0].mxu0
        %628 = vdwg.mxu0
        %629 = vmatprep.subr.mxu0 0.0
        %630 = vmatpush1.msra.mxu0 %v337
        %631 = vmatprep.subr.mxu0 0.0
        %632 = vmatpush1.msra.mxu0 %v338
        %633 = vmatprep.subr.mxu0 0.0
        %634 = vmatpush1.msra.mxu0 %v339
        %635 = vmatprep.subr.mxu0 0.0
        %636 = vmatpush1.msra.mxu0 %v340
        %637 = vmatprep.subr.mxu0 0.0
        %638 = vmatpush1.msra.mxu0 %v341
        %639 = vmatprep.subr.mxu0 0.0
        %640 = vmatpush1.msra.mxu0 %v342
        %641 = vmatprep.subr.mxu0 0.0
        %642 = vmatpush1.msra.mxu0 %v343
        %643 = vmatprep.subr.mxu0 0.0
        %644 = vmatpush1.msra.mxu0 %v344
        %645 = vmatprep.subr.mxu0 0.0
        %646 = vmatpush1.msra.mxu0 %v345
        %647 = vmatprep.subr.mxu0 0.0
        %648 = vmatpush1.msra.mxu0 %v346
        %649 = vmatprep.subr.mxu0 0.0
        %650 = vmatpush1.msra.mxu0 %v347
        %651 = vmatprep.subr.mxu0 0.0
        %652 = vmatpush1.msra.mxu0 %v348
        %653 = vmatprep.subr.mxu0 0.0
        %654 = vmatpush1.msra.mxu0 %v349
        %655 = vmatprep.subr.mxu0 0.0
        %656 = vmatpush1.msra.mxu0 %v350
        %657 = vmatprep.subr.mxu0 0.0
        %658 = vmatpush1.msra.mxu0 %v351
        %659 = vmatprep.subr.mxu0 0.0
        %660 = vmatpush1.msra.mxu0 %v352
        %661 = vmatprep.subr.mxu0 0.0
        %662 = vmatpush1.msra.mxu0 0.0
        %663 = vmatprep.subr.mxu0 0.0
        %664 = vmatpush1.msra.mxu0 0.0
        %665 = vmatprep.subr.mxu0 0.0
        %666 = vmatpush1.msra.mxu0 0.0
        %667 = vmatprep.subr.mxu0 0.0
        %668 = vmatpush1.msra.mxu0 0.0
        %669 = vmatprep.subr.mxu0 0.0
        %670 = vmatpush1.msra.mxu0 0.0
        %671 = vmatprep.subr.mxu0 0.0
        %672 = vmatpush1.msra.mxu0 0.0
        %673 = vmatprep.subr.mxu0 0.0
        %674 = vmatpush1.msra.mxu0 0.0
        %675 = vmatprep.subr.mxu0 0.0
        %676 = vmatpush1.msra.mxu0 0.0
        %677 = vmatprep.subr.mxu0 0.0
        %678 = vmatpush1.msra.mxu0 0.0
        %679 = vmatprep.subr.mxu0 0.0
        %680 = vmatpush1.msra.mxu0 0.0
        %681 = vmatprep.subr.mxu0 0.0
        %682 = vmatpush1.msra.mxu0 0.0
        %683 = vmatprep.subr.mxu0 0.0
        %684 = vmatpush1.msra.mxu0 0.0
        %685 = vmatprep.subr.mxu0 0.0
        %686 = vmatpush1.msra.mxu0 0.0
        %687 = vmatprep.subr.mxu0 0.0
        %688 = vmatpush1.msra.mxu0 0.0
        %689 = vmatprep.subr.mxu0 0.0
        %690 = vmatpush1.msra.mxu0 0.0
        %691 = vmatprep.subr.mxu0 0.0
        %692 = vmatpush1.msra.mxu0 0.0
        %693 = vmatprep.mubr.f32.mxu0 0.0
        %694 = vmatmul.mubr.f32.gmra.mrb[0].mxu0 %v305
        %v695 = vpop.f32.mrb[0].mxu0
        %v696 = vadd.f32 %v471, %v695
        %v697 = vpop.f32.mrb[0].mxu0
        %698 = vmatprep.mubr.f32.mxu0 0.0
        %699 = vmatmul.mubr.f32.gmra.mrb[0].mxu0 %v306
        %v700 = vpop.f32.mrb[0].mxu0
        %v701 = vadd.f32 %v476, %v700
        %v702 = vpop.f32.mrb[0].mxu0
        %703 = vmatprep.mubr.f32.mxu0 0.0
        %704 = vmatmul.mubr.f32.gmra.mrb[0].mxu0 %v307
        %v705 = vpop.f32.mrb[0].mxu0
        %v706 = vadd.f32 %v481, %v705
        %v707 = vpop.f32.mrb[0].mxu0
        %708 = vmatprep.mubr.f32.mxu0 0.0
        %709 = vmatmul.mubr.f32.gmra.mrb[0].mxu0 %v308
        %v710 = vpop.f32.mrb[0].mxu0
        %v711 = vadd.f32 %v486, %v710
        %v712 = vpop.f32.mrb[0].mxu0
        %713 = vmatprep.mubr.f32.mxu0 0.0
        %714 = vmatmul.mubr.f32.gmra.mrb[0].mxu0 %v309
        %v715 = vpop.f32.mrb[0].mxu0
        %v716 = vadd.f32 %v491, %v715
        %v717 = vpop.f32.mrb[0].mxu0
        %718 = vmatprep.mubr.f32.mxu0 0.0
        %719 = vmatmul.mubr.f32.gmra.mrb[0].mxu0 %v310
        %v720 = vpop.f32.mrb[0].mxu0
        %v721 = vadd.f32 %v496, %v720
        %v722 = vpop.f32.mrb[0].mxu0
        %723 = vmatprep.mubr.f32.mxu0 0.0
        %724 = vmatmul.mubr.f32.gmra.mrb[0].mxu0 %v311
        %v725 = vpop.f32.mrb[0].mxu0
        %v726 = vadd.f32 %v501, %v725
        %v727 = vpop.f32.mrb[0].mxu0
        %728 = vmatprep.mubr.f32.mxu0 0.0
        %729 = vmatmul.mubr.f32.gmra.mrb[0].mxu0 %v312
        %v730 = vpop.f32.mrb[0].mxu0
        %v731 = vadd.f32 %v506, %v730
        %v732 = vpop.f32.mrb[0].mxu0
        %733 = vmatprep.mubr.f32.mxu0 0.0
        %734 = vmatmul.mubr.f32.gmra.mrb[0].mxu0 %v313
        %v735 = vpop.f32.mrb[0].mxu0
        %v736 = vadd.f32 %v511, %v735
        %v737 = vpop.f32.mrb[0].mxu0
        %738 = vmatprep.mubr.f32.mxu0 0.0
        %739 = vmatmul.mubr.f32.gmra.mrb[0].mxu0 %v314
        %v740 = vpop.f32.mrb[0].mxu0
        %v741 = vadd.f32 %v516, %v740
        %v742 = vpop.f32.mrb[0].mxu0
        %743 = vmatprep.mubr.f32.mxu0 0.0
        %744 = vmatmul.mubr.f32.gmra.mrb[0].mxu0 %v315
        %v745 = vpop.f32.mrb[0].mxu0
        %v746 = vadd.f32 %v521, %v745
        %v747 = vpop.f32.mrb[0].mxu0
        %748 = vmatprep.mubr.f32.mxu0 0.0
        %749 = vmatmul.mubr.f32.gmra.mrb[0].mxu0 %v316
        %v750 = vpop.f32.mrb[0].mxu0
        %v751 = vadd.f32 %v526, %v750
        %v752 = vpop.f32.mrb[0].mxu0
        %753 = vmatprep.mubr.f32.mxu0 0.0
        %754 = vmatmul.mubr.f32.gmra.mrb[0].mxu0 %v317
        %v755 = vpop.f32.mrb[0].mxu0
        %v756 = vadd.f32 %v531, %v755
        %v757 = vpop.f32.mrb[0].mxu0
        %758 = vmatprep.mubr.f32.mxu0 0.0
        %759 = vmatmul.mubr.f32.gmra.mrb[0].mxu0 %v318
        %v760 = vpop.f32.mrb[0].mxu0
        %v761 = vadd.f32 %v536, %v760
        %v762 = vpop.f32.mrb[0].mxu0
        %763 = vmatprep.mubr.f32.mxu0 0.0
        %764 = vmatmul.mubr.f32.gmra.mrb[0].mxu0 %v319
        %v765 = vpop.f32.mrb[0].mxu0
        %v766 = vadd.f32 %v541, %v765
        %v767 = vpop.f32.mrb[0].mxu0
        %768 = vmatprep.mubr.f32.mxu0 0.0
        %769 = vmatmul.mubr.f32.gmra.mrb[0].mxu0 %v320
        %v770 = vpop.f32.mrb[0].mxu0
        %v771 = vadd.f32 %v546, %v770
        %v772 = vpop.f32.mrb[0].mxu0
        %773 = vmatprep.mubr.f32.mxu0 0.0
        %774 = vmatmul.mubr.f32.gmra.mrb[0].mxu0 %v321
        %v775 = vpop.f32.mrb[0].mxu0
        %v776 = vadd.f32 %v551, %v775
        %v777 = vpop.f32.mrb[0].mxu0
        %778 = vmatprep.mubr.f32.mxu0 0.0
        %779 = vmatmul.mubr.f32.gmra.mrb[0].mxu0 %v322
        %v780 = vpop.f32.mrb[0].mxu0
        %v781 = vadd.f32 %v556, %v780
        %v782 = vpop.f32.mrb[0].mxu0
        %783 = vmatprep.mubr.f32.mxu0 0.0
        %784 = vmatmul.mubr.f32.gmra.mrb[0].mxu0 %v323
        %v785 = vpop.f32.mrb[0].mxu0
        %v786 = vadd.f32 %v561, %v785
        %v787 = vpop.f32.mrb[0].mxu0
        %788 = vmatprep.mubr.f32.mxu0 0.0
        %789 = vmatmul.mubr.f32.gmra.mrb[0].mxu0 %v324
        %v790 = vpop.f32.mrb[0].mxu0
        %v791 = vadd.f32 %v566, %v790
        %v792 = vpop.f32.mrb[0].mxu0
        %793 = vmatprep.mubr.f32.mxu0 0.0
        %794 = vmatmul.mubr.f32.gmra.mrb[0].mxu0 %v325
        %v795 = vpop.f32.mrb[0].mxu0
        %v796 = vadd.f32 %v571, %v795
        %v797 = vpop.f32.mrb[0].mxu0
        %798 = vmatprep.mubr.f32.mxu0 0.0
        %799 = vmatmul.mubr.f32.gmra.mrb[0].mxu0 %v326
        %v800 = vpop.f32.mrb[0].mxu0
        %v801 = vadd.f32 %v576, %v800
        %v802 = vpop.f32.mrb[0].mxu0
        %803 = vmatprep.mubr.f32.mxu0 0.0
        %804 = vmatmul.mubr.f32.gmra.mrb[0].mxu0 %v327
        %v805 = vpop.f32.mrb[0].mxu0
        %v806 = vadd.f32 %v581, %v805
        %v807 = vpop.f32.mrb[0].mxu0
        %808 = vmatprep.mubr.f32.mxu0 0.0
        %809 = vmatmul.mubr.f32.gmra.mrb[0].mxu0 %v328
        %v810 = vpop.f32.mrb[0].mxu0
        %v811 = vadd.f32 %v586, %v810
        %v812 = vpop.f32.mrb[0].mxu0
        %813 = vmatprep.mubr.f32.mxu0 0.0
        %814 = vmatmul.mubr.f32.gmra.mrb[0].mxu0 %v329
        %v815 = vpop.f32.mrb[0].mxu0
        %v816 = vadd.f32 %v591, %v815
        %v817 = vpop.f32.mrb[0].mxu0
        %818 = vmatprep.mubr.f32.mxu0 0.0
        %819 = vmatmul.mubr.f32.gmra.mrb[0].mxu0 %v330
        %v820 = vpop.f32.mrb[0].mxu0
        %v821 = vadd.f32 %v596, %v820
        %v822 = vpop.f32.mrb[0].mxu0
        %823 = vmatprep.mubr.f32.mxu0 0.0
        %824 = vmatmul.mubr.f32.gmra.mrb[0].mxu0 %v331
        %v825 = vpop.f32.mrb[0].mxu0
        %v826 = vadd.f32 %v601, %v825
        %v827 = vpop.f32.mrb[0].mxu0
        %828 = vmatprep.mubr.f32.mxu0 0.0
        %829 = vmatmul.mubr.f32.gmra.mrb[0].mxu0 %v332
        %v830 = vpop.f32.mrb[0].mxu0
        %v831 = vadd.f32 %v606, %v830
        %v832 = vpop.f32.mrb[0].mxu0
        %833 = vmatprep.mubr.f32.mxu0 0.0
        %834 = vmatmul.mubr.f32.gmra.mrb[0].mxu0 %v333
        %v835 = vpop.f32.mrb[0].mxu0
        %v836 = vadd.f32 %v611, %v835
        %v837 = vpop.f32.mrb[0].mxu0
        %838 = vmatprep.mubr.f32.mxu0 0.0
        %839 = vmatmul.mubr.f32.gmra.mrb[0].mxu0 %v334
        %v840 = vpop.f32.mrb[0].mxu0
        %v841 = vadd.f32 %v616, %v840
        %v842 = vpop.f32.mrb[0].mxu0
        %843 = vmatprep.mubr.f32.mxu0 0.0
        %844 = vmatmul.mubr.f32.gmra.mrb[0].mxu0 %v335
        %v845 = vpop.f32.mrb[0].mxu0
        %v846 = vadd.f32 %v621, %v845
        %v847 = vpop.f32.mrb[0].mxu0
        %848 = vmatprep.mubr.f32.mxu0 0.0
        %849 = vmatmul.mubr.f32.gmra.mrb[0].mxu0 %v336
        %v850 = vpop.f32.mrb[0].mxu0
        %v851 = vadd.f32 %v626, %v850
        %v852 = vpop.f32.mrb[0].mxu0
        %853 = vdwg.mxu0
        %s854 = sadd.s32 %s303, 32
        %s855 = scalar_lea.vmem %s254, %s854 [#allocation2]
        %v856 = vld [vmem:[%s855] sm:$0xff]
        %v857 = vld [vmem:[%s855 + $0x8] sm:$0xff]
        %v858 = vld [vmem:[%s855 + $0x10] sm:$0xff]
        %v859 = vld [vmem:[%s855 + $0x18] sm:$0xff]
        %v860 = vld [vmem:[%s855 + $0x20] sm:$0xff]
        %v861 = vld [vmem:[%s855 + $0x28] sm:$0xff]
        %v862 = vld [vmem:[%s855 + $0x30] sm:$0xff]
        %v863 = vld [vmem:[%s855 + $0x38] sm:$0xff]
        %v864 = vld [vmem:[%s855 + $0x40] sm:$0xff]
        %v865 = vld [vmem:[%s855 + $0x48] sm:$0xff]
        %v866 = vld [vmem:[%s855 + $0x50] sm:$0xff]
        %v867 = vld [vmem:[%s855 + $0x58] sm:$0xff]
        %v868 = vld [vmem:[%s855 + $0x60] sm:$0xff]
        %v869 = vld [vmem:[%s855 + $0x68] sm:$0xff]
        %v870 = vld [vmem:[%s855 + $0x70] sm:$0xff]
        %v871 = vld [vmem:[%s855 + $0x78] sm:$0xff]
        %v872 = vld [vmem:[%s855 + $0x80] sm:$0xff]
        %v873 = vld [vmem:[%s855 + $0x88] sm:$0xff]
        %v874 = vld [vmem:[%s855 + $0x90] sm:$0xff]
        %v875 = vld [vmem:[%s855 + $0x98] sm:$0xff]
        %v876 = vld [vmem:[%s855 + $0xa0] sm:$0xff]
        %v877 = vld [vmem:[%s855 + $0xa8] sm:$0xff]
        %v878 = vld [vmem:[%s855 + $0xb0] sm:$0xff]
        %v879 = vld [vmem:[%s855 + $0xb8] sm:$0xff]
        %v880 = vld [vmem:[%s855 + $0xc0] sm:$0xff]
        %v881 = vld [vmem:[%s855 + $0xc8] sm:$0xff]
        %v882 = vld [vmem:[%s855 + $0xd0] sm:$0xff]
        %v883 = vld [vmem:[%s855 + $0xd8] sm:$0xff]
        %v884 = vld [vmem:[%s855 + $0xe0] sm:$0xff]
        %v885 = vld [vmem:[%s855 + $0xe8] sm:$0xff]
        %v886 = vld [vmem:[%s855 + $0xf0] sm:$0xff]
        %v887 = vld [vmem:[%s855 + $0xf8] sm:$0xff]
        %s888 = scalar_lea.vmem [#allocation5], 256
        %v889 = vld [vmem:[%s888] sm:$0xff]
        %v890 = vld [vmem:[%s888 + $0x8] sm:$0xff]
        %v891 = vld [vmem:[%s888 + $0x10] sm:$0xff]
        %v892 = vld [vmem:[%s888 + $0x18] sm:$0xff]
        %v893 = vld [vmem:[%s888 + $0x20] sm:$0xff]
        %v894 = vld [vmem:[%s888 + $0x28] sm:$0xff]
        %v895 = vld [vmem:[%s888 + $0x30] sm:$0xff]
        %v896 = vld [vmem:[%s888 + $0x38] sm:$0xff]
        %v897 = vld [vmem:[%s888 + $0x40] sm:$0xff]
        %v898 = vld [vmem:[%s888 + $0x48] sm:$0xff]
        %v899 = vld [vmem:[%s888 + $0x50] sm:$0xff]
        %v900 = vld [vmem:[%s888 + $0x58] sm:$0xff]
        %v901 = vld [vmem:[%s888 + $0x60] sm:$0xff]
        %v902 = vld [vmem:[%s888 + $0x68] sm:$0xff]
        %v903 = vld [vmem:[%s888 + $0x70] sm:$0xff]
        %v904 = vld [vmem:[%s888 + $0x78] sm:$0xff]
        %905 = vmatprep.subr.mxu0 0.0
        %906 = vmatpush1.msra.mxu0 %v889
        %907 = vmatprep.subr.mxu0 0.0
        %908 = vmatpush1.msra.mxu0 %v890
        %909 = vmatprep.subr.mxu0 0.0
        %910 = vmatpush1.msra.mxu0 %v891
        %911 = vmatprep.subr.mxu0 0.0
        %912 = vmatpush1.msra.mxu0 %v892
        %913 = vmatprep.subr.mxu0 0.0
        %914 = vmatpush1.msra.mxu0 %v893
        %915 = vmatprep.subr.mxu0 0.0
        %916 = vmatpush1.msra.mxu0 %v894
        %917 = vmatprep.subr.mxu0 0.0
        %918 = vmatpush1.msra.mxu0 %v895
        %919 = vmatprep.subr.mxu0 0.0
        %920 = vmatpush1.msra.mxu0 %v896
        %921 = vmatprep.subr.mxu0 0.0
        %922 = vmatpush1.msra.mxu0 %v897
        %923 = vmatprep.subr.mxu0 0.0
        %924 = vmatpush1.msra.mxu0 %v898
        %925 = vmatprep.subr.mxu0 0.0
        %926 = vmatpush1.msra.mxu0 %v899
        %927 = vmatprep.subr.mxu0 0.0
        %928 = vmatpush1.msra.mxu0 %v900
        %929 = vmatprep.subr.mxu0 0.0
        %930 = vmatpush1.msra.mxu0 %v901
        %931 = vmatprep.subr.mxu0 0.0
        %932 = vmatpush1.msra.mxu0 %v902
        %933 = vmatprep.subr.mxu0 0.0
        %934 = vmatpush1.msra.mxu0 %v903
        %935 = vmatprep.subr.mxu0 0.0
        %936 = vmatpush1.msra.mxu0 %v904
        %937 = vmatprep.subr.mxu0 0.0
        %938 = vmatpush1.msra.mxu0 0.0
        %939 = vmatprep.subr.mxu0 0.0
        %940 = vmatpush1.msra.mxu0 0.0
        %941 = vmatprep.subr.mxu0 0.0
        %942 = vmatpush1.msra.mxu0 0.0
        %943 = vmatprep.subr.mxu0 0.0
        %944 = vmatpush1.msra.mxu0 0.0
        %945 = vmatprep.subr.mxu0 0.0
        %946 = vmatpush1.msra.mxu0 0.0
        %947 = vmatprep.subr.mxu0 0.0
        %948 = vmatpush1.msra.mxu0 0.0
        %949 = vmatprep.subr.mxu0 0.0
        %950 = vmatpush1.msra.mxu0 0.0
        %951 = vmatprep.subr.mxu0 0.0
        %952 = vmatpush1.msra.mxu0 0.0
        %953 = vmatprep.subr.mxu0 0.0
        %954 = vmatpush1.msra.mxu0 0.0
        %955 = vmatprep.subr.mxu0 0.0
        %956 = vmatpush1.msra.mxu0 0.0
        %957 = vmatprep.subr.mxu0 0.0
        %958 = vmatpush1.msra.mxu0 0.0
        %959 = vmatprep.subr.mxu0 0.0
        %960 = vmatpush1.msra.mxu0 0.0
        %961 = vmatprep.subr.mxu0 0.0
        %962 = vmatpush1.msra.mxu0 0.0
        %963 = vmatprep.subr.mxu0 0.0
        %964 = vmatpush1.msra.mxu0 0.0
        %965 = vmatprep.subr.mxu0 0.0
        %966 = vmatpush1.msra.mxu0 0.0
        %967 = vmatprep.subr.mxu0 0.0
        %968 = vmatpush1.msra.mxu0 0.0
        %969 = vmatprep.mubr.f32.mxu0 0.0
        %970 = vmatmul.mubr.f32.gmra.mrb[0].mxu0 %v856
        %v971 = vpop.f32.mrb[0].mxu0
        %v972 = vadd.f32 0.0, %v971
        %v973 = vpop.f32.mrb[0].mxu0
        %974 = vmatprep.mubr.f32.mxu0 0.0
        %975 = vmatmul.mubr.f32.gmra.mrb[0].mxu0 %v857
        %v976 = vpop.f32.mrb[0].mxu0
        %v977 = vadd.f32 0.0, %v976
        %v978 = vpop.f32.mrb[0].mxu0
        %979 = vmatprep.mubr.f32.mxu0 0.0
        %980 = vmatmul.mubr.f32.gmra.mrb[0].mxu0 %v858
        %v981 = vpop.f32.mrb[0].mxu0
        %v982 = vadd.f32 0.0, %v981
        %v983 = vpop.f32.mrb[0].mxu0
        %984 = vmatprep.mubr.f32.mxu0 0.0
        %985 = vmatmul.mubr.f32.gmra.mrb[0].mxu0 %v859
        %v986 = vpop.f32.mrb[0].mxu0
        %v987 = vadd.f32 0.0, %v986
        %v988 = vpop.f32.mrb[0].mxu0
        %989 = vmatprep.mubr.f32.mxu0 0.0
        %990 = vmatmul.mubr.f32.gmra.mrb[0].mxu0 %v860
        %v991 = vpop.f32.mrb[0].mxu0
        %v992 = vadd.f32 0.0, %v991
        %v993 = vpop.f32.mrb[0].mxu0
        %994 = vmatprep.mubr.f32.mxu0 0.0
        %995 = vmatmul.mubr.f32.gmra.mrb[0].mxu0 %v861
        %v996 = vpop.f32.mrb[0].mxu0
        %v997 = vadd.f32 0.0, %v996
        %v998 = vpop.f32.mrb[0].mxu0
        %999 = vmatprep.mubr.f32.mxu0 0.0
        %1000 = vmatmul.mubr.f32.gmra.mrb[0].mxu0 %v862
        %v1001 = vpop.f32.mrb[0].mxu0
        %v1002 = vadd.f32 0.0, %v1001
        %v1003 = vpop.f32.mrb[0].mxu0
        %1004 = vmatprep.mubr.f32.mxu0 0.0
        %1005 = vmatmul.mubr.f32.gmra.mrb[0].mxu0 %v863
        %v1006 = vpop.f32.mrb[0].mxu0
        %v1007 = vadd.f32 0.0, %v1006
        %v1008 = vpop.f32.mrb[0].mxu0
        %1009 = vmatprep.mubr.f32.mxu0 0.0
        %1010 = vmatmul.mubr.f32.gmra.mrb[0].mxu0 %v864
        %v1011 = vpop.f32.mrb[0].mxu0
        %v1012 = vadd.f32 0.0, %v1011
        %v1013 = vpop.f32.mrb[0].mxu0
        %1014 = vmatprep.mubr.f32.mxu0 0.0
        %1015 = vmatmul.mubr.f32.gmra.mrb[0].mxu0 %v865
        %v1016 = vpop.f32.mrb[0].mxu0
        %v1017 = vadd.f32 0.0, %v1016
        %v1018 = vpop.f32.mrb[0].mxu0
        %1019 = vmatprep.mubr.f32.mxu0 0.0
        %1020 = vmatmul.mubr.f32.gmra.mrb[0].mxu0 %v866
        %v1021 = vpop.f32.mrb[0].mxu0
        %v1022 = vadd.f32 0.0, %v1021
        %v1023 = vpop.f32.mrb[0].mxu0
        %1024 = vmatprep.mubr.f32.mxu0 0.0
        %1025 = vmatmul.mubr.f32.gmra.mrb[0].mxu0 %v867
        %v1026 = vpop.f32.mrb[0].mxu0
        %v1027 = vadd.f32 0.0, %v1026
        %v1028 = vpop.f32.mrb[0].mxu0
        %1029 = vmatprep.mubr.f32.mxu0 0.0
        %1030 = vmatmul.mubr.f32.gmra.mrb[0].mxu0 %v868
        %v1031 = vpop.f32.mrb[0].mxu0
        %v1032 = vadd.f32 0.0, %v1031
        %v1033 = vpop.f32.mrb[0].mxu0
        %1034 = vmatprep.mubr.f32.mxu0 0.0
        %1035 = vmatmul.mubr.f32.gmra.mrb[0].mxu0 %v869
        %v1036 = vpop.f32.mrb[0].mxu0
        %v1037 = vadd.f32 0.0, %v1036
        %v1038 = vpop.f32.mrb[0].mxu0
        %1039 = vmatprep.mubr.f32.mxu0 0.0
        %1040 = vmatmul.mubr.f32.gmra.mrb[0].mxu0 %v870
        %v1041 = vpop.f32.mrb[0].mxu0
        %v1042 = vadd.f32 0.0, %v1041
        %v1043 = vpop.f32.mrb[0].mxu0
        %1044 = vmatprep.mubr.f32.mxu0 0.0
        %1045 = vmatmul.mubr.f32.gmra.mrb[0].mxu0 %v871
        %v1046 = vpop.f32.mrb[0].mxu0
        %v1047 = vadd.f32 0.0, %v1046
        %v1048 = vpop.f32.mrb[0].mxu0
        %1049 = vmatprep.mubr.f32.mxu0 0.0
        %1050 = vmatmul.mubr.f32.gmra.mrb[0].mxu0 %v872
        %v1051 = vpop.f32.mrb[0].mxu0
        %v1052 = vadd.f32 0.0, %v1051
        %v1053 = vpop.f32.mrb[0].mxu0
        %1054 = vmatprep.mubr.f32.mxu0 0.0
        %1055 = vmatmul.mubr.f32.gmra.mrb[0].mxu0 %v873
        %v1056 = vpop.f32.mrb[0].mxu0
        %v1057 = vadd.f32 0.0, %v1056
        %v1058 = vpop.f32.mrb[0].mxu0
        %1059 = vmatprep.mubr.f32.mxu0 0.0
        %1060 = vmatmul.mubr.f32.gmra.mrb[0].mxu0 %v874
        %v1061 = vpop.f32.mrb[0].mxu0
        %v1062 = vadd.f32 0.0, %v1061
        %v1063 = vpop.f32.mrb[0].mxu0
        %1064 = vmatprep.mubr.f32.mxu0 0.0
        %1065 = vmatmul.mubr.f32.gmra.mrb[0].mxu0 %v875
        %v1066 = vpop.f32.mrb[0].mxu0
        %v1067 = vadd.f32 0.0, %v1066
        %v1068 = vpop.f32.mrb[0].mxu0
        %1069 = vmatprep.mubr.f32.mxu0 0.0
        %1070 = vmatmul.mubr.f32.gmra.mrb[0].mxu0 %v876
        %v1071 = vpop.f32.mrb[0].mxu0
        %v1072 = vadd.f32 0.0, %v1071
        %v1073 = vpop.f32.mrb[0].mxu0
        %1074 = vmatprep.mubr.f32.mxu0 0.0
        %1075 = vmatmul.mubr.f32.gmra.mrb[0].mxu0 %v877
        %v1076 = vpop.f32.mrb[0].mxu0
        %v1077 = vadd.f32 0.0, %v1076
        %v1078 = vpop.f32.mrb[0].mxu0
        %1079 = vmatprep.mubr.f32.mxu0 0.0
        %1080 = vmatmul.mubr.f32.gmra.mrb[0].mxu0 %v878
        %v1081 = vpop.f32.mrb[0].mxu0
        %v1082 = vadd.f32 0.0, %v1081
        %v1083 = vpop.f32.mrb[0].mxu0
        %1084 = vmatprep.mubr.f32.mxu0 0.0
        %1085 = vmatmul.mubr.f32.gmra.mrb[0].mxu0 %v879
        %v1086 = vpop.f32.mrb[0].mxu0
        %v1087 = vadd.f32 0.0, %v1086
        %v1088 = vpop.f32.mrb[0].mxu0
        %1089 = vmatprep.mubr.f32.mxu0 0.0
        %1090 = vmatmul.mubr.f32.gmra.mrb[0].mxu0 %v880
        %v1091 = vpop.f32.mrb[0].mxu0
        %v1092 = vadd.f32 0.0, %v1091
        %v1093 = vpop.f32.mrb[0].mxu0
        %1094 = vmatprep.mubr.f32.mxu0 0.0
        %1095 = vmatmul.mubr.f32.gmra.mrb[0].mxu0 %v881
        %v1096 = vpop.f32.mrb[0].mxu0
        %v1097 = vadd.f32 0.0, %v1096
        %v1098 = vpop.f32.mrb[0].mxu0
        %1099 = vmatprep.mubr.f32.mxu0 0.0
        %1100 = vmatmul.mubr.f32.gmra.mrb[0].mxu0 %v882
        %v1101 = vpop.f32.mrb[0].mxu0
        %v1102 = vadd.f32 0.0, %v1101
        %v1103 = vpop.f32.mrb[0].mxu0
        %1104 = vmatprep.mubr.f32.mxu0 0.0
        %1105 = vmatmul.mubr.f32.gmra.mrb[0].mxu0 %v883
        %v1106 = vpop.f32.mrb[0].mxu0
        %v1107 = vadd.f32 0.0, %v1106
        %v1108 = vpop.f32.mrb[0].mxu0
        %1109 = vmatprep.mubr.f32.mxu0 0.0
        %1110 = vmatmul.mubr.f32.gmra.mrb[0].mxu0 %v884
        %v1111 = vpop.f32.mrb[0].mxu0
        %v1112 = vadd.f32 0.0, %v1111
        %v1113 = vpop.f32.mrb[0].mxu0
        %1114 = vmatprep.mubr.f32.mxu0 0.0
        %1115 = vmatmul.mubr.f32.gmra.mrb[0].mxu0 %v885
        %v1116 = vpop.f32.mrb[0].mxu0
        %v1117 = vadd.f32 0.0, %v1116
        %v1118 = vpop.f32.mrb[0].mxu0
        %1119 = vmatprep.mubr.f32.mxu0 0.0
        %1120 = vmatmul.mubr.f32.gmra.mrb[0].mxu0 %v886
        %v1121 = vpop.f32.mrb[0].mxu0
        %v1122 = vadd.f32 0.0, %v1121
        %v1123 = vpop.f32.mrb[0].mxu0
        %1124 = vmatprep.mubr.f32.mxu0 0.0
        %1125 = vmatmul.mubr.f32.gmra.mrb[0].mxu0 %v887
        %v1126 = vpop.f32.mrb[0].mxu0
        %v1127 = vadd.f32 0.0, %v1126
        %v1128 = vpop.f32.mrb[0].mxu0
        %1129 = vdwg.mxu0
        %v1130 = vadd.f32 %v696, %v972
        %v1131 = vadd.f32 %v701, %v977
        %v1132 = vadd.f32 %v706, %v982
        %v1133 = vadd.f32 %v711, %v987
        %v1134 = vadd.f32 %v716, %v992
        %v1135 = vadd.f32 %v721, %v997
        %v1136 = vadd.f32 %v726, %v1002
        %v1137 = vadd.f32 %v731, %v1007
        %v1138 = vadd.f32 %v736, %v1012
        %v1139 = vadd.f32 %v741, %v1017
        %v1140 = vadd.f32 %v746, %v1022
        %v1141 = vadd.f32 %v751, %v1027
        %v1142 = vadd.f32 %v756, %v1032
        %v1143 = vadd.f32 %v761, %v1037
        %v1144 = vadd.f32 %v766, %v1042
        %v1145 = vadd.f32 %v771, %v1047
        %v1146 = vadd.f32 %v776, %v1052
        %v1147 = vadd.f32 %v781, %v1057
        %v1148 = vadd.f32 %v786, %v1062
        %v1149 = vadd.f32 %v791, %v1067
        %v1150 = vadd.f32 %v796, %v1072
        %v1151 = vadd.f32 %v801, %v1077
        %v1152 = vadd.f32 %v806, %v1082
        %v1153 = vadd.f32 %v811, %v1087
        %v1154 = vadd.f32 %v816, %v1092
        %v1155 = vadd.f32 %v821, %v1097
        %v1156 = vadd.f32 %v826, %v1102
        %v1157 = vadd.f32 %v831, %v1107
        %v1158 = vadd.f32 %v836, %v1112
        %v1159 = vadd.f32 %v841, %v1117
        %v1160 = vadd.f32 %v846, %v1122
        %v1161 = vadd.f32 %v851, %v1127
        %s1162 = sadd.s32 %s303, 48
        %s1163 = scalar_lea.vmem %s254, %s1162 [#allocation2]
        %v1164 = vld [vmem:[%s1163] sm:$0xff]
        %v1165 = vld [vmem:[%s1163 + $0x8] sm:$0xff]
        %v1166 = vld [vmem:[%s1163 + $0x10] sm:$0xff]
        %v1167 = vld [vmem:[%s1163 + $0x18] sm:$0xff]
        %v1168 = vld [vmem:[%s1163 + $0x20] sm:$0xff]
        %v1169 = vld [vmem:[%s1163 + $0x28] sm:$0xff]
        %v1170 = vld [vmem:[%s1163 + $0x30] sm:$0xff]
        %v1171 = vld [vmem:[%s1163 + $0x38] sm:$0xff]
        %v1172 = vld [vmem:[%s1163 + $0x40] sm:$0xff]
        %v1173 = vld [vmem:[%s1163 + $0x48] sm:$0xff]
        %v1174 = vld [vmem:[%s1163 + $0x50] sm:$0xff]
        %v1175 = vld [vmem:[%s1163 + $0x58] sm:$0xff]
        %v1176 = vld [vmem:[%s1163 + $0x60] sm:$0xff]
        %v1177 = vld [vmem:[%s1163 + $0x68] sm:$0xff]
        %v1178 = vld [vmem:[%s1163 + $0x70] sm:$0xff]
        %v1179 = vld [vmem:[%s1163 + $0x78] sm:$0xff]
        %v1180 = vld [vmem:[%s1163 + $0x80] sm:$0xff]
        %v1181 = vld [vmem:[%s1163 + $0x88] sm:$0xff]
        %v1182 = vld [vmem:[%s1163 + $0x90] sm:$0xff]
        %v1183 = vld [vmem:[%s1163 + $0x98] sm:$0xff]
        %v1184 = vld [vmem:[%s1163 + $0xa0] sm:$0xff]
        %v1185 = vld [vmem:[%s1163 + $0xa8] sm:$0xff]
        %v1186 = vld [vmem:[%s1163 + $0xb0] sm:$0xff]
        %v1187 = vld [vmem:[%s1163 + $0xb8] sm:$0xff]
        %v1188 = vld [vmem:[%s1163 + $0xc0] sm:$0xff]
        %v1189 = vld [vmem:[%s1163 + $0xc8] sm:$0xff]
        %v1190 = vld [vmem:[%s1163 + $0xd0] sm:$0xff]
        %v1191 = vld [vmem:[%s1163 + $0xd8] sm:$0xff]
        %v1192 = vld [vmem:[%s1163 + $0xe0] sm:$0xff]
        %v1193 = vld [vmem:[%s1163 + $0xe8] sm:$0xff]
        %v1194 = vld [vmem:[%s1163 + $0xf0] sm:$0xff]
        %v1195 = vld [vmem:[%s1163 + $0xf8] sm:$0xff]
        %s1196 = scalar_lea.vmem [#allocation5], 384
        %v1197 = vld [vmem:[%s1196] sm:$0xff]
        %v1198 = vld [vmem:[%s1196 + $0x8] sm:$0xff]
        %v1199 = vld [vmem:[%s1196 + $0x10] sm:$0xff]
        %v1200 = vld [vmem:[%s1196 + $0x18] sm:$0xff]
        %v1201 = vld [vmem:[%s1196 + $0x20] sm:$0xff]
        %v1202 = vld [vmem:[%s1196 + $0x28] sm:$0xff]
        %v1203 = vld [vmem:[%s1196 + $0x30] sm:$0xff]
        %v1204 = vld [vmem:[%s1196 + $0x38] sm:$0xff]
        %v1205 = vld [vmem:[%s1196 + $0x40] sm:$0xff]
        %v1206 = vld [vmem:[%s1196 + $0x48] sm:$0xff]
        %v1207 = vld [vmem:[%s1196 + $0x50] sm:$0xff]
        %v1208 = vld [vmem:[%s1196 + $0x58] sm:$0xff]
        %v1209 = vld [vmem:[%s1196 + $0x60] sm:$0xff]
        %v1210 = vld [vmem:[%s1196 + $0x68] sm:$0xff]
        %v1211 = vld [vmem:[%s1196 + $0x70] sm:$0xff]
        %v1212 = vld [vmem:[%s1196 + $0x78] sm:$0xff]
        %1213 = vmatprep.subr.mxu0 0.0
        %1214 = vmatpush1.msra.mxu0 %v1197
        %1215 = vmatprep.subr.mxu0 0.0
        %1216 = vmatpush1.msra.mxu0 %v1198
        %1217 = vmatprep.subr.mxu0 0.0
        %1218 = vmatpush1.msra.mxu0 %v1199
        %1219 = vmatprep.subr.mxu0 0.0
        %1220 = vmatpush1.msra.mxu0 %v1200
        %1221 = vmatprep.subr.mxu0 0.0
        %1222 = vmatpush1.msra.mxu0 %v1201
        %1223 = vmatprep.subr.mxu0 0.0
        %1224 = vmatpush1.msra.mxu0 %v1202
        %1225 = vmatprep.subr.mxu0 0.0
        %1226 = vmatpush1.msra.mxu0 %v1203
        %1227 = vmatprep.subr.mxu0 0.0
        %1228 = vmatpush1.msra.mxu0 %v1204
        %1229 = vmatprep.subr.mxu0 0.0
        %1230 = vmatpush1.msra.mxu0 %v1205
        %1231 = vmatprep.subr.mxu0 0.0
        %1232 = vmatpush1.msra.mxu0 %v1206
        %1233 = vmatprep.subr.mxu0 0.0
        %1234 = vmatpush1.msra.mxu0 %v1207
        %1235 = vmatprep.subr.mxu0 0.0
        %1236 = vmatpush1.msra.mxu0 %v1208
        %1237 = vmatprep.subr.mxu0 0.0
        %1238 = vmatpush1.msra.mxu0 %v1209
        %1239 = vmatprep.subr.mxu0 0.0
        %1240 = vmatpush1.msra.mxu0 %v1210
        %1241 = vmatprep.subr.mxu0 0.0
        %1242 = vmatpush1.msra.mxu0 %v1211
        %1243 = vmatprep.subr.mxu0 0.0
        %1244 = vmatpush1.msra.mxu0 %v1212
        %1245 = vmatprep.subr.mxu0 0.0
        %1246 = vmatpush1.msra.mxu0 0.0
        %1247 = vmatprep.subr.mxu0 0.0
        %1248 = vmatpush1.msra.mxu0 0.0
        %1249 = vmatprep.subr.mxu0 0.0
        %1250 = vmatpush1.msra.mxu0 0.0
        %1251 = vmatprep.subr.mxu0 0.0
        %1252 = vmatpush1.msra.mxu0 0.0
        %1253 = vmatprep.subr.mxu0 0.0
        %1254 = vmatpush1.msra.mxu0 0.0
        %1255 = vmatprep.subr.mxu0 0.0
        %1256 = vmatpush1.msra.mxu0 0.0
        %1257 = vmatprep.subr.mxu0 0.0
        %1258 = vmatpush1.msra.mxu0 0.0
        %1259 = vmatprep.subr.mxu0 0.0
        %1260 = vmatpush1.msra.mxu0 0.0
        %1261 = vmatprep.subr.mxu0 0.0
        %1262 = vmatpush1.msra.mxu0 0.0
        %1263 = vmatprep.subr.mxu0 0.0
        %1264 = vmatpush1.msra.mxu0 0.0
        %1265 = vmatprep.subr.mxu0 0.0
        %1266 = vmatpush1.msra.mxu0 0.0
        %1267 = vmatprep.subr.mxu0 0.0
        %1268 = vmatpush1.msra.mxu0 0.0
        %1269 = vmatprep.subr.mxu0 0.0
        %1270 = vmatpush1.msra.mxu0 0.0
        %1271 = vmatprep.subr.mxu0 0.0
        %1272 = vmatpush1.msra.mxu0 0.0
        %1273 = vmatprep.subr.mxu0 0.0
        %1274 = vmatpush1.msra.mxu0 0.0
        %1275 = vmatprep.subr.mxu0 0.0
        %1276 = vmatpush1.msra.mxu0 0.0
        %1277 = vmatprep.mubr.f32.mxu0 0.0
        %1278 = vmatmul.mubr.f32.gmra.mrb[0].mxu0 %v1164
        %v1279 = vpop.f32.mrb[0].mxu0
        %v1280 = vadd.f32 0.0, %v1279
        %v1281 = vpop.f32.mrb[0].mxu0
        %1282 = vmatprep.mubr.f32.mxu0 0.0
        %1283 = vmatmul.mubr.f32.gmra.mrb[0].mxu0 %v1165
        %v1284 = vpop.f32.mrb[0].mxu0
        %v1285 = vadd.f32 0.0, %v1284
        %v1286 = vpop.f32.mrb[0].mxu0
        %1287 = vmatprep.mubr.f32.mxu0 0.0
        %1288 = vmatmul.mubr.f32.gmra.mrb[0].mxu0 %v1166
        %v1289 = vpop.f32.mrb[0].mxu0
        %v1290 = vadd.f32 0.0, %v1289
        %v1291 = vpop.f32.mrb[0].mxu0
        %1292 = vmatprep.mubr.f32.mxu0 0.0
        %1293 = vmatmul.mubr.f32.gmra.mrb[0].mxu0 %v1167
        %v1294 = vpop.f32.mrb[0].mxu0
        %v1295 = vadd.f32 0.0, %v1294
        %v1296 = vpop.f32.mrb[0].mxu0
        %1297 = vmatprep.mubr.f32.mxu0 0.0
        %1298 = vmatmul.mubr.f32.gmra.mrb[0].mxu0 %v1168
        %v1299 = vpop.f32.mrb[0].mxu0
        %v1300 = vadd.f32 0.0, %v1299
        %v1301 = vpop.f32.mrb[0].mxu0
        %1302 = vmatprep.mubr.f32.mxu0 0.0
        %1303 = vmatmul.mubr.f32.gmra.mrb[0].mxu0 %v1169
        %v1304 = vpop.f32.mrb[0].mxu0
        %v1305 = vadd.f32 0.0, %v1304
        %v1306 = vpop.f32.mrb[0].mxu0
        %1307 = vmatprep.mubr.f32.mxu0 0.0
        %1308 = vmatmul.mubr.f32.gmra.mrb[0].mxu0 %v1170
        %v1309 = vpop.f32.mrb[0].mxu0
        %v1310 = vadd.f32 0.0, %v1309
        %v1311 = vpop.f32.mrb[0].mxu0
        %1312 = vmatprep.mubr.f32.mxu0 0.0
        %1313 = vmatmul.mubr.f32.gmra.mrb[0].mxu0 %v1171
        %v1314 = vpop.f32.mrb[0].mxu0
        %v1315 = vadd.f32 0.0, %v1314
        %v1316 = vpop.f32.mrb[0].mxu0
        %1317 = vmatprep.mubr.f32.mxu0 0.0
        %1318 = vmatmul.mubr.f32.gmra.mrb[0].mxu0 %v1172
        %v1319 = vpop.f32.mrb[0].mxu0
        %v1320 = vadd.f32 0.0, %v1319
        %v1321 = vpop.f32.mrb[0].mxu0
        %1322 = vmatprep.mubr.f32.mxu0 0.0
        %1323 = vmatmul.mubr.f32.gmra.mrb[0].mxu0 %v1173
        %v1324 = vpop.f32.mrb[0].mxu0
        %v1325 = vadd.f32 0.0, %v1324
        %v1326 = vpop.f32.mrb[0].mxu0
        %1327 = vmatprep.mubr.f32.mxu0 0.0
        %1328 = vmatmul.mubr.f32.gmra.mrb[0].mxu0 %v1174
        %v1329 = vpop.f32.mrb[0].mxu0
        %v1330 = vadd.f32 0.0, %v1329
        %v1331 = vpop.f32.mrb[0].mxu0
        %1332 = vmatprep.mubr.f32.mxu0 0.0
        %1333 = vmatmul.mubr.f32.gmra.mrb[0].mxu0 %v1175
        %v1334 = vpop.f32.mrb[0].mxu0
        %v1335 = vadd.f32 0.0, %v1334
        %v1336 = vpop.f32.mrb[0].mxu0
        %1337 = vmatprep.mubr.f32.mxu0 0.0
        %1338 = vmatmul.mubr.f32.gmra.mrb[0].mxu0 %v1176
        %v1339 = vpop.f32.mrb[0].mxu0
        %v1340 = vadd.f32 0.0, %v1339
        %v1341 = vpop.f32.mrb[0].mxu0
        %1342 = vmatprep.mubr.f32.mxu0 0.0
        %1343 = vmatmul.mubr.f32.gmra.mrb[0].mxu0 %v1177
        %v1344 = vpop.f32.mrb[0].mxu0
        %v1345 = vadd.f32 0.0, %v1344
        %v1346 = vpop.f32.mrb[0].mxu0
        %1347 = vmatprep.mubr.f32.mxu0 0.0
        %1348 = vmatmul.mubr.f32.gmra.mrb[0].mxu0 %v1178
        %v1349 = vpop.f32.mrb[0].mxu0
        %v1350 = vadd.f32 0.0, %v1349
        %v1351 = vpop.f32.mrb[0].mxu0
        %1352 = vmatprep.mubr.f32.mxu0 0.0
        %1353 = vmatmul.mubr.f32.gmra.mrb[0].mxu0 %v1179
        %v1354 = vpop.f32.mrb[0].mxu0
        %v1355 = vadd.f32 0.0, %v1354
        %v1356 = vpop.f32.mrb[0].mxu0
        %1357 = vmatprep.mubr.f32.mxu0 0.0
        %1358 = vmatmul.mubr.f32.gmra.mrb[0].mxu0 %v1180
        %v1359 = vpop.f32.mrb[0].mxu0
        %v1360 = vadd.f32 0.0, %v1359
        %v1361 = vpop.f32.mrb[0].mxu0
        %1362 = vmatprep.mubr.f32.mxu0 0.0
        %1363 = vmatmul.mubr.f32.gmra.mrb[0].mxu0 %v1181
        %v1364 = vpop.f32.mrb[0].mxu0
        %v1365 = vadd.f32 0.0, %v1364
        %v1366 = vpop.f32.mrb[0].mxu0
        %1367 = vmatprep.mubr.f32.mxu0 0.0
        %1368 = vmatmul.mubr.f32.gmra.mrb[0].mxu0 %v1182
        %v1369 = vpop.f32.mrb[0].mxu0
        %v1370 = vadd.f32 0.0, %v1369
        %v1371 = vpop.f32.mrb[0].mxu0
        %1372 = vmatprep.mubr.f32.mxu0 0.0
        %1373 = vmatmul.mubr.f32.gmra.mrb[0].mxu0 %v1183
        %v1374 = vpop.f32.mrb[0].mxu0
        %v1375 = vadd.f32 0.0, %v1374
        %v1376 = vpop.f32.mrb[0].mxu0
        %1377 = vmatprep.mubr.f32.mxu0 0.0
        %1378 = vmatmul.mubr.f32.gmra.mrb[0].mxu0 %v1184
        %v1379 = vpop.f32.mrb[0].mxu0
        %v1380 = vadd.f32 0.0, %v1379
        %v1381 = vpop.f32.mrb[0].mxu0
        %1382 = vmatprep.mubr.f32.mxu0 0.0
        %1383 = vmatmul.mubr.f32.gmra.mrb[0].mxu0 %v1185
        %v1384 = vpop.f32.mrb[0].mxu0
        %v1385 = vadd.f32 0.0, %v1384
        %v1386 = vpop.f32.mrb[0].mxu0
        %1387 = vmatprep.mubr.f32.mxu0 0.0
        %1388 = vmatmul.mubr.f32.gmra.mrb[0].mxu0 %v1186
        %v1389 = vpop.f32.mrb[0].mxu0
        %v1390 = vadd.f32 0.0, %v1389
        %v1391 = vpop.f32.mrb[0].mxu0
        %1392 = vmatprep.mubr.f32.mxu0 0.0
        %1393 = vmatmul.mubr.f32.gmra.mrb[0].mxu0 %v1187
        %v1394 = vpop.f32.mrb[0].mxu0
        %v1395 = vadd.f32 0.0, %v1394
        %v1396 = vpop.f32.mrb[0].mxu0
        %1397 = vmatprep.mubr.f32.mxu0 0.0
        %1398 = vmatmul.mubr.f32.gmra.mrb[0].mxu0 %v1188
        %v1399 = vpop.f32.mrb[0].mxu0
        %v1400 = vadd.f32 0.0, %v1399
        %v1401 = vpop.f32.mrb[0].mxu0
        %1402 = vmatprep.mubr.f32.mxu0 0.0
        %1403 = vmatmul.mubr.f32.gmra.mrb[0].mxu0 %v1189
        %v1404 = vpop.f32.mrb[0].mxu0
        %v1405 = vadd.f32 0.0, %v1404
        %v1406 = vpop.f32.mrb[0].mxu0
        %1407 = vmatprep.mubr.f32.mxu0 0.0
        %1408 = vmatmul.mubr.f32.gmra.mrb[0].mxu0 %v1190
        %v1409 = vpop.f32.mrb[0].mxu0
        %v1410 = vadd.f32 0.0, %v1409
        %v1411 = vpop.f32.mrb[0].mxu0
        %1412 = vmatprep.mubr.f32.mxu0 0.0
        %1413 = vmatmul.mubr.f32.gmra.mrb[0].mxu0 %v1191
        %v1414 = vpop.f32.mrb[0].mxu0
        %v1415 = vadd.f32 0.0, %v1414
        %v1416 = vpop.f32.mrb[0].mxu0
        %1417 = vmatprep.mubr.f32.mxu0 0.0
        %1418 = vmatmul.mubr.f32.gmra.mrb[0].mxu0 %v1192
        %v1419 = vpop.f32.mrb[0].mxu0
        %v1420 = vadd.f32 0.0, %v1419
        %v1421 = vpop.f32.mrb[0].mxu0
        %1422 = vmatprep.mubr.f32.mxu0 0.0
        %1423 = vmatmul.mubr.f32.gmra.mrb[0].mxu0 %v1193
        %v1424 = vpop.f32.mrb[0].mxu0
        %v1425 = vadd.f32 0.0, %v1424
        %v1426 = vpop.f32.mrb[0].mxu0
        %1427 = vmatprep.mubr.f32.mxu0 0.0
        %1428 = vmatmul.mubr.f32.gmra.mrb[0].mxu0 %v1194
        %v1429 = vpop.f32.mrb[0].mxu0
        %v1430 = vadd.f32 0.0, %v1429
        %v1431 = vpop.f32.mrb[0].mxu0
        %1432 = vmatprep.mubr.f32.mxu0 0.0
        %1433 = vmatmul.mubr.f32.gmra.mrb[0].mxu0 %v1195
        %v1434 = vpop.f32.mrb[0].mxu0
        %v1435 = vadd.f32 0.0, %v1434
        %v1436 = vpop.f32.mrb[0].mxu0
        %1437 = vdwg.mxu0
        %v1438 = vadd.f32 %v1130, %v1280
        %v1439 = vadd.f32 %v1131, %v1285
        %v1440 = vadd.f32 %v1132, %v1290
        %v1441 = vadd.f32 %v1133, %v1295
        %v1442 = vadd.f32 %v1134, %v1300
        %v1443 = vadd.f32 %v1135, %v1305
        %v1444 = vadd.f32 %v1136, %v1310
        %v1445 = vadd.f32 %v1137, %v1315
        %v1446 = vadd.f32 %v1138, %v1320
        %v1447 = vadd.f32 %v1139, %v1325
        %v1448 = vadd.f32 %v1140, %v1330
        %v1449 = vadd.f32 %v1141, %v1335
        %v1450 = vadd.f32 %v1142, %v1340
        %v1451 = vadd.f32 %v1143, %v1345
        %v1452 = vadd.f32 %v1144, %v1350
        %v1453 = vadd.f32 %v1145, %v1355
        %v1454 = vadd.f32 %v1146, %v1360
        %v1455 = vadd.f32 %v1147, %v1365
        %v1456 = vadd.f32 %v1148, %v1370
        %v1457 = vadd.f32 %v1149, %v1375
        %v1458 = vadd.f32 %v1150, %v1380
        %v1459 = vadd.f32 %v1151, %v1385
        %v1460 = vadd.f32 %v1152, %v1390
        %v1461 = vadd.f32 %v1153, %v1395
        %v1462 = vadd.f32 %v1154, %v1400
        %v1463 = vadd.f32 %v1155, %v1405
        %v1464 = vadd.f32 %v1156, %v1410
        %v1465 = vadd.f32 %v1157, %v1415
        %v1466 = vadd.f32 %v1158, %v1420
        %v1467 = vadd.f32 %v1159, %v1425
        %v1468 = vadd.f32 %v1160, %v1430
        %v1469 = vadd.f32 %v1161, %v1435
        %s1470 = sadd.s32 %s303, 64
        %s1471 = scalar_lea.vmem %s254, %s1470 [#allocation2]
        %v1472 = vld [vmem:[%s1471] sm:$0xff]
        %v1473 = vld [vmem:[%s1471 + $0x8] sm:$0xff]
        %v1474 = vld [vmem:[%s1471 + $0x10] sm:$0xff]
        %v1475 = vld [vmem:[%s1471 + $0x18] sm:$0xff]
        %v1476 = vld [vmem:[%s1471 + $0x20] sm:$0xff]
        %v1477 = vld [vmem:[%s1471 + $0x28] sm:$0xff]
        %v1478 = vld [vmem:[%s1471 + $0x30] sm:$0xff]
        %v1479 = vld [vmem:[%s1471 + $0x38] sm:$0xff]
        %v1480 = vld [vmem:[%s1471 + $0x40] sm:$0xff]
        %v1481 = vld [vmem:[%s1471 + $0x48] sm:$0xff]
        %v1482 = vld [vmem:[%s1471 + $0x50] sm:$0xff]
        %v1483 = vld [vmem:[%s1471 + $0x58] sm:$0xff]
        %v1484 = vld [vmem:[%s1471 + $0x60] sm:$0xff]
        %v1485 = vld [vmem:[%s1471 + $0x68] sm:$0xff]
        %v1486 = vld [vmem:[%s1471 + $0x70] sm:$0xff]
        %v1487 = vld [vmem:[%s1471 + $0x78] sm:$0xff]
        %v1488 = vld [vmem:[%s1471 + $0x80] sm:$0xff]
        %v1489 = vld [vmem:[%s1471 + $0x88] sm:$0xff]
        %v1490 = vld [vmem:[%s1471 + $0x90] sm:$0xff]
        %v1491 = vld [vmem:[%s1471 + $0x98] sm:$0xff]
        %v1492 = vld [vmem:[%s1471 + $0xa0] sm:$0xff]
        %v1493 = vld [vmem:[%s1471 + $0xa8] sm:$0xff]
        %v1494 = vld [vmem:[%s1471 + $0xb0] sm:$0xff]
        %v1495 = vld [vmem:[%s1471 + $0xb8] sm:$0xff]
        %v1496 = vld [vmem:[%s1471 + $0xc0] sm:$0xff]
        %v1497 = vld [vmem:[%s1471 + $0xc8] sm:$0xff]
        %v1498 = vld [vmem:[%s1471 + $0xd0] sm:$0xff]
        %v1499 = vld [vmem:[%s1471 + $0xd8] sm:$0xff]
        %v1500 = vld [vmem:[%s1471 + $0xe0] sm:$0xff]
        %v1501 = vld [vmem:[%s1471 + $0xe8] sm:$0xff]
        %v1502 = vld [vmem:[%s1471 + $0xf0] sm:$0xff]
        %v1503 = vld [vmem:[%s1471 + $0xf8] sm:$0xff]
        %s1504 = scalar_lea.vmem [#allocation5], 512
        %v1505 = vld [vmem:[%s1504] sm:$0xff]
        %v1506 = vld [vmem:[%s1504 + $0x8] sm:$0xff]
        %v1507 = vld [vmem:[%s1504 + $0x10] sm:$0xff]
        %v1508 = vld [vmem:[%s1504 + $0x18] sm:$0xff]
        %v1509 = vld [vmem:[%s1504 + $0x20] sm:$0xff]
        %v1510 = vld [vmem:[%s1504 + $0x28] sm:$0xff]
        %v1511 = vld [vmem:[%s1504 + $0x30] sm:$0xff]
        %v1512 = vld [vmem:[%s1504 + $0x38] sm:$0xff]
        %v1513 = vld [vmem:[%s1504 + $0x40] sm:$0xff]
        %v1514 = vld [vmem:[%s1504 + $0x48] sm:$0xff]
        %v1515 = vld [vmem:[%s1504 + $0x50] sm:$0xff]
        %v1516 = vld [vmem:[%s1504 + $0x58] sm:$0xff]
        %v1517 = vld [vmem:[%s1504 + $0x60] sm:$0xff]
        %v1518 = vld [vmem:[%s1504 + $0x68] sm:$0xff]
        %v1519 = vld [vmem:[%s1504 + $0x70] sm:$0xff]
        %v1520 = vld [vmem:[%s1504 + $0x78] sm:$0xff]
        %1521 = vmatprep.subr.mxu0 0.0
        %1522 = vmatpush1.msra.mxu0 %v1505
        %1523 = vmatprep.subr.mxu0 0.0
        %1524 = vmatpush1.msra.mxu0 %v1506
        %1525 = vmatprep.subr.mxu0 0.0
        %1526 = vmatpush1.msra.mxu0 %v1507
        %1527 = vmatprep.subr.mxu0 0.0
        %1528 = vmatpush1.msra.mxu0 %v1508
        %1529 = vmatprep.subr.mxu0 0.0
        %1530 = vmatpush1.msra.mxu0 %v1509
        %1531 = vmatprep.subr.mxu0 0.0
        %1532 = vmatpush1.msra.mxu0 %v1510
        %1533 = vmatprep.subr.mxu0 0.0
        %1534 = vmatpush1.msra.mxu0 %v1511
        %1535 = vmatprep.subr.mxu0 0.0
        %1536 = vmatpush1.msra.mxu0 %v1512
        %1537 = vmatprep.subr.mxu0 0.0
        %1538 = vmatpush1.msra.mxu0 %v1513
        %1539 = vmatprep.subr.mxu0 0.0
        %1540 = vmatpush1.msra.mxu0 %v1514
        %1541 = vmatprep.subr.mxu0 0.0
        %1542 = vmatpush1.msra.mxu0 %v1515
        %1543 = vmatprep.subr.mxu0 0.0
        %1544 = vmatpush1.msra.mxu0 %v1516
        %1545 = vmatprep.subr.mxu0 0.0
        %1546 = vmatpush1.msra.mxu0 %v1517
        %1547 = vmatprep.subr.mxu0 0.0
        %1548 = vmatpush1.msra.mxu0 %v1518
        %1549 = vmatprep.subr.mxu0 0.0
        %1550 = vmatpush1.msra.mxu0 %v1519
        %1551 = vmatprep.subr.mxu0 0.0
        %1552 = vmatpush1.msra.mxu0 %v1520
        %1553 = vmatprep.subr.mxu0 0.0
        %1554 = vmatpush1.msra.mxu0 0.0
        %1555 = vmatprep.subr.mxu0 0.0
        %1556 = vmatpush1.msra.mxu0 0.0
        %1557 = vmatprep.subr.mxu0 0.0
        %1558 = vmatpush1.msra.mxu0 0.0
        %1559 = vmatprep.subr.mxu0 0.0
        %1560 = vmatpush1.msra.mxu0 0.0
        %1561 = vmatprep.subr.mxu0 0.0
        %1562 = vmatpush1.msra.mxu0 0.0
        %1563 = vmatprep.subr.mxu0 0.0
        %1564 = vmatpush1.msra.mxu0 0.0
        %1565 = vmatprep.subr.mxu0 0.0
        %1566 = vmatpush1.msra.mxu0 0.0
        %1567 = vmatprep.subr.mxu0 0.0
        %1568 = vmatpush1.msra.mxu0 0.0
        %1569 = vmatprep.subr.mxu0 0.0
        %1570 = vmatpush1.msra.mxu0 0.0
        %1571 = vmatprep.subr.mxu0 0.0
        %1572 = vmatpush1.msra.mxu0 0.0
        %1573 = vmatprep.subr.mxu0 0.0
        %1574 = vmatpush1.msra.mxu0 0.0
        %1575 = vmatprep.subr.mxu0 0.0
        %1576 = vmatpush1.msra.mxu0 0.0
        %1577 = vmatprep.subr.mxu0 0.0
        %1578 = vmatpush1.msra.mxu0 0.0
        %1579 = vmatprep.subr.mxu0 0.0
        %1580 = vmatpush1.msra.mxu0 0.0
        %1581 = vmatprep.subr.mxu0 0.0
        %1582 = vmatpush1.msra.mxu0 0.0
        %1583 = vmatprep.subr.mxu0 0.0
        %1584 = vmatpush1.msra.mxu0 0.0
        %1585 = vmatprep.mubr.f32.mxu0 0.0
        %1586 = vmatmul.mubr.f32.gmra.mrb[0].mxu0 %v1472
        %v1587 = vpop.f32.mrb[0].mxu0
        %v1588 = vadd.f32 0.0, %v1587
        %v1589 = vpop.f32.mrb[0].mxu0
        %1590 = vmatprep.mubr.f32.mxu0 0.0
        %1591 = vmatmul.mubr.f32.gmra.mrb[0].mxu0 %v1473
        %v1592 = vpop.f32.mrb[0].mxu0
        %v1593 = vadd.f32 0.0, %v1592
        %v1594 = vpop.f32.mrb[0].mxu0
        %1595 = vmatprep.mubr.f32.mxu0 0.0
        %1596 = vmatmul.mubr.f32.gmra.mrb[0].mxu0 %v1474
        %v1597 = vpop.f32.mrb[0].mxu0
        %v1598 = vadd.f32 0.0, %v1597
        %v1599 = vpop.f32.mrb[0].mxu0
        %1600 = vmatprep.mubr.f32.mxu0 0.0
        %1601 = vmatmul.mubr.f32.gmra.mrb[0].mxu0 %v1475
        %v1602 = vpop.f32.mrb[0].mxu0
        %v1603 = vadd.f32 0.0, %v1602
        %v1604 = vpop.f32.mrb[0].mxu0
        %1605 = vmatprep.mubr.f32.mxu0 0.0
        %1606 = vmatmul.mubr.f32.gmra.mrb[0].mxu0 %v1476
        %v1607 = vpop.f32.mrb[0].mxu0
        %v1608 = vadd.f32 0.0, %v1607
        %v1609 = vpop.f32.mrb[0].mxu0
        %1610 = vmatprep.mubr.f32.mxu0 0.0
        %1611 = vmatmul.mubr.f32.gmra.mrb[0].mxu0 %v1477
        %v1612 = vpop.f32.mrb[0].mxu0
        %v1613 = vadd.f32 0.0, %v1612
        %v1614 = vpop.f32.mrb[0].mxu0
        %1615 = vmatprep.mubr.f32.mxu0 0.0
        %1616 = vmatmul.mubr.f32.gmra.mrb[0].mxu0 %v1478
        %v1617 = vpop.f32.mrb[0].mxu0
        %v1618 = vadd.f32 0.0, %v1617
        %v1619 = vpop.f32.mrb[0].mxu0
        %1620 = vmatprep.mubr.f32.mxu0 0.0
        %1621 = vmatmul.mubr.f32.gmra.mrb[0].mxu0 %v1479
        %v1622 = vpop.f32.mrb[0].mxu0
        %v1623 = vadd.f32 0.0, %v1622
        %v1624 = vpop.f32.mrb[0].mxu0
        %1625 = vmatprep.mubr.f32.mxu0 0.0
        %1626 = vmatmul.mubr.f32.gmra.mrb[0].mxu0 %v1480
        %v1627 = vpop.f32.mrb[0].mxu0
        %v1628 = vadd.f32 0.0, %v1627
        %v1629 = vpop.f32.mrb[0].mxu0
        %1630 = vmatprep.mubr.f32.mxu0 0.0
        %1631 = vmatmul.mubr.f32.gmra.mrb[0].mxu0 %v1481
        %v1632 = vpop.f32.mrb[0].mxu0
        %v1633 = vadd.f32 0.0, %v1632
        %v1634 = vpop.f32.mrb[0].mxu0
        %1635 = vmatprep.mubr.f32.mxu0 0.0
        %1636 = vmatmul.mubr.f32.gmra.mrb[0].mxu0 %v1482
        %v1637 = vpop.f32.mrb[0].mxu0
        %v1638 = vadd.f32 0.0, %v1637
        %v1639 = vpop.f32.mrb[0].mxu0
        %1640 = vmatprep.mubr.f32.mxu0 0.0
        %1641 = vmatmul.mubr.f32.gmra.mrb[0].mxu0 %v1483
        %v1642 = vpop.f32.mrb[0].mxu0
        %v1643 = vadd.f32 0.0, %v1642
        %v1644 = vpop.f32.mrb[0].mxu0
        %1645 = vmatprep.mubr.f32.mxu0 0.0
        %1646 = vmatmul.mubr.f32.gmra.mrb[0].mxu0 %v1484
        %v1647 = vpop.f32.mrb[0].mxu0
        %v1648 = vadd.f32 0.0, %v1647
        %v1649 = vpop.f32.mrb[0].mxu0
        %1650 = vmatprep.mubr.f32.mxu0 0.0
        %1651 = vmatmul.mubr.f32.gmra.mrb[0].mxu0 %v1485
        %v1652 = vpop.f32.mrb[0].mxu0
        %v1653 = vadd.f32 0.0, %v1652
        %v1654 = vpop.f32.mrb[0].mxu0
        %1655 = vmatprep.mubr.f32.mxu0 0.0
        %1656 = vmatmul.mubr.f32.gmra.mrb[0].mxu0 %v1486
        %v1657 = vpop.f32.mrb[0].mxu0
        %v1658 = vadd.f32 0.0, %v1657
        %v1659 = vpop.f32.mrb[0].mxu0
        %1660 = vmatprep.mubr.f32.mxu0 0.0
        %1661 = vmatmul.mubr.f32.gmra.mrb[0].mxu0 %v1487
        %v1662 = vpop.f32.mrb[0].mxu0
        %v1663 = vadd.f32 0.0, %v1662
        %v1664 = vpop.f32.mrb[0].mxu0
        %1665 = vmatprep.mubr.f32.mxu0 0.0
        %1666 = vmatmul.mubr.f32.gmra.mrb[0].mxu0 %v1488
        %v1667 = vpop.f32.mrb[0].mxu0
        %v1668 = vadd.f32 0.0, %v1667
        %v1669 = vpop.f32.mrb[0].mxu0
        %1670 = vmatprep.mubr.f32.mxu0 0.0
        %1671 = vmatmul.mubr.f32.gmra.mrb[0].mxu0 %v1489
        %v1672 = vpop.f32.mrb[0].mxu0
        %v1673 = vadd.f32 0.0, %v1672
        %v1674 = vpop.f32.mrb[0].mxu0
        %1675 = vmatprep.mubr.f32.mxu0 0.0
        %1676 = vmatmul.mubr.f32.gmra.mrb[0].mxu0 %v1490
        %v1677 = vpop.f32.mrb[0].mxu0
        %v1678 = vadd.f32 0.0, %v1677
        %v1679 = vpop.f32.mrb[0].mxu0
        %1680 = vmatprep.mubr.f32.mxu0 0.0
        %1681 = vmatmul.mubr.f32.gmra.mrb[0].mxu0 %v1491
        %v1682 = vpop.f32.mrb[0].mxu0
        %v1683 = vadd.f32 0.0, %v1682
        %v1684 = vpop.f32.mrb[0].mxu0
        %1685 = vmatprep.mubr.f32.mxu0 0.0
        %1686 = vmatmul.mubr.f32.gmra.mrb[0].mxu0 %v1492
        %v1687 = vpop.f32.mrb[0].mxu0
        %v1688 = vadd.f32 0.0, %v1687
        %v1689 = vpop.f32.mrb[0].mxu0
        %1690 = vmatprep.mubr.f32.mxu0 0.0
        %1691 = vmatmul.mubr.f32.gmra.mrb[0].mxu0 %v1493
        %v1692 = vpop.f32.mrb[0].mxu0
        %v1693 = vadd.f32 0.0, %v1692
        %v1694 = vpop.f32.mrb[0].mxu0
        %1695 = vmatprep.mubr.f32.mxu0 0.0
        %1696 = vmatmul.mubr.f32.gmra.mrb[0].mxu0 %v1494
        %v1697 = vpop.f32.mrb[0].mxu0
        %v1698 = vadd.f32 0.0, %v1697
        %v1699 = vpop.f32.mrb[0].mxu0
        %1700 = vmatprep.mubr.f32.mxu0 0.0
        %1701 = vmatmul.mubr.f32.gmra.mrb[0].mxu0 %v1495
        %v1702 = vpop.f32.mrb[0].mxu0
        %v1703 = vadd.f32 0.0, %v1702
        %v1704 = vpop.f32.mrb[0].mxu0
        %1705 = vmatprep.mubr.f32.mxu0 0.0
        %1706 = vmatmul.mubr.f32.gmra.mrb[0].mxu0 %v1496
        %v1707 = vpop.f32.mrb[0].mxu0
        %v1708 = vadd.f32 0.0, %v1707
        %v1709 = vpop.f32.mrb[0].mxu0
        %1710 = vmatprep.mubr.f32.mxu0 0.0
        %1711 = vmatmul.mubr.f32.gmra.mrb[0].mxu0 %v1497
        %v1712 = vpop.f32.mrb[0].mxu0
        %v1713 = vadd.f32 0.0, %v1712
        %v1714 = vpop.f32.mrb[0].mxu0
        %1715 = vmatprep.mubr.f32.mxu0 0.0
        %1716 = vmatmul.mubr.f32.gmra.mrb[0].mxu0 %v1498
        %v1717 = vpop.f32.mrb[0].mxu0
        %v1718 = vadd.f32 0.0, %v1717
        %v1719 = vpop.f32.mrb[0].mxu0
        %1720 = vmatprep.mubr.f32.mxu0 0.0
        %1721 = vmatmul.mubr.f32.gmra.mrb[0].mxu0 %v1499
        %v1722 = vpop.f32.mrb[0].mxu0
        %v1723 = vadd.f32 0.0, %v1722
        %v1724 = vpop.f32.mrb[0].mxu0
        %1725 = vmatprep.mubr.f32.mxu0 0.0
        %1726 = vmatmul.mubr.f32.gmra.mrb[0].mxu0 %v1500
        %v1727 = vpop.f32.mrb[0].mxu0
        %v1728 = vadd.f32 0.0, %v1727
        %v1729 = vpop.f32.mrb[0].mxu0
        %1730 = vmatprep.mubr.f32.mxu0 0.0
        %1731 = vmatmul.mubr.f32.gmra.mrb[0].mxu0 %v1501
        %v1732 = vpop.f32.mrb[0].mxu0
        %v1733 = vadd.f32 0.0, %v1732
        %v1734 = vpop.f32.mrb[0].mxu0
        %1735 = vmatprep.mubr.f32.mxu0 0.0
        %1736 = vmatmul.mubr.f32.gmra.mrb[0].mxu0 %v1502
        %v1737 = vpop.f32.mrb[0].mxu0
        %v1738 = vadd.f32 0.0, %v1737
        %v1739 = vpop.f32.mrb[0].mxu0
        %1740 = vmatprep.mubr.f32.mxu0 0.0
        %1741 = vmatmul.mubr.f32.gmra.mrb[0].mxu0 %v1503
        %v1742 = vpop.f32.mrb[0].mxu0
        %v1743 = vadd.f32 0.0, %v1742
        %v1744 = vpop.f32.mrb[0].mxu0
        %1745 = vdwg.mxu0
        %v1746 = vadd.f32 %v1438, %v1588
        %v1747 = vadd.f32 %v1439, %v1593
        %v1748 = vadd.f32 %v1440, %v1598
        %v1749 = vadd.f32 %v1441, %v1603
        %v1750 = vadd.f32 %v1442, %v1608
        %v1751 = vadd.f32 %v1443, %v1613
        %v1752 = vadd.f32 %v1444, %v1618
        %v1753 = vadd.f32 %v1445, %v1623
        %v1754 = vadd.f32 %v1446, %v1628
        %v1755 = vadd.f32 %v1447, %v1633
        %v1756 = vadd.f32 %v1448, %v1638
        %v1757 = vadd.f32 %v1449, %v1643
        %v1758 = vadd.f32 %v1450, %v1648
        %v1759 = vadd.f32 %v1451, %v1653
        %v1760 = vadd.f32 %v1452, %v1658
        %v1761 = vadd.f32 %v1453, %v1663
        %v1762 = vadd.f32 %v1454, %v1668
        %v1763 = vadd.f32 %v1455, %v1673
        %v1764 = vadd.f32 %v1456, %v1678
        %v1765 = vadd.f32 %v1457, %v1683
        %v1766 = vadd.f32 %v1458, %v1688
        %v1767 = vadd.f32 %v1459, %v1693
        %v1768 = vadd.f32 %v1460, %v1698
        %v1769 = vadd.f32 %v1461, %v1703
        %v1770 = vadd.f32 %v1462, %v1708
        %v1771 = vadd.f32 %v1463, %v1713
        %v1772 = vadd.f32 %v1464, %v1718
        %v1773 = vadd.f32 %v1465, %v1723
        %v1774 = vadd.f32 %v1466, %v1728
        %v1775 = vadd.f32 %v1467, %v1733
        %v1776 = vadd.f32 %v1468, %v1738
        %v1777 = vadd.f32 %v1469, %v1743
        %v1778 = vld [vmem:[#allocation7] sm:$0x1]
        %v1780 = vlaneseq
        %v1781 = vshrl.u32 %v1780, 7
        %v1782 = vsub.s32 0, %v1781
        %v1783 = vrot.slane %v1778, %v1782
        %v1785 = vadd.f32 %v1746, %v1783
        %v1786 = vadd.f32 %v1747, %v1783
        %v1787 = vadd.f32 %v1748, %v1783
        %v1788 = vadd.f32 %v1749, %v1783
        %v1789 = vadd.f32 %v1750, %v1783
        %v1790 = vadd.f32 %v1751, %v1783
        %v1791 = vadd.f32 %v1752, %v1783
        %v1792 = vadd.f32 %v1753, %v1783
        %v1793 = vadd.f32 %v1754, %v1783
        %v1794 = vadd.f32 %v1755, %v1783
        %v1795 = vadd.f32 %v1756, %v1783
        %v1796 = vadd.f32 %v1757, %v1783
        %v1797 = vadd.f32 %v1758, %v1783
        %v1798 = vadd.f32 %v1759, %v1783
        %v1799 = vadd.f32 %v1760, %v1783
        %v1800 = vadd.f32 %v1761, %v1783
        %v1801 = vadd.f32 %v1762, %v1783
        %v1802 = vadd.f32 %v1763, %v1783
        %v1803 = vadd.f32 %v1764, %v1783
        %v1804 = vadd.f32 %v1765, %v1783
        %v1805 = vadd.f32 %v1766, %v1783
        %v1806 = vadd.f32 %v1767, %v1783
        %v1807 = vadd.f32 %v1768, %v1783
        %v1808 = vadd.f32 %v1769, %v1783
        %v1809 = vadd.f32 %v1770, %v1783
        %v1810 = vadd.f32 %v1771, %v1783
        %v1811 = vadd.f32 %v1772, %v1783
        %v1812 = vadd.f32 %v1773, %v1783
        %v1813 = vadd.f32 %v1774, %v1783
        %v1814 = vadd.f32 %v1775, %v1783
        %v1815 = vadd.f32 %v1776, %v1783
        %v1816 = vadd.f32 %v1777, %v1783
        %v1817 = vld [vmem:[%s271] sm:$0xff]
        %v1818 = vld [vmem:[%s271 + $0x8] sm:$0xff]
        %v1819 = vld [vmem:[%s271 + $0x10] sm:$0xff]
        %v1820 = vld [vmem:[%s271 + $0x18] sm:$0xff]
        %v1821 = vld [vmem:[%s271 + $0x20] sm:$0xff]
        %v1822 = vld [vmem:[%s271 + $0x28] sm:$0xff]
        %v1823 = vld [vmem:[%s271 + $0x30] sm:$0xff]
        %v1824 = vld [vmem:[%s271 + $0x38] sm:$0xff]
        %v1825 = vld [vmem:[%s271 + $0x40] sm:$0xff]
        %v1826 = vld [vmem:[%s271 + $0x48] sm:$0xff]
        %v1827 = vld [vmem:[%s271 + $0x50] sm:$0xff]
        %v1828 = vld [vmem:[%s271 + $0x58] sm:$0xff]
        %v1829 = vld [vmem:[%s271 + $0x60] sm:$0xff]
        %v1830 = vld [vmem:[%s271 + $0x68] sm:$0xff]
        %v1831 = vld [vmem:[%s271 + $0x70] sm:$0xff]
        %v1832 = vld [vmem:[%s271 + $0x78] sm:$0xff]
        %v1833 = vld [vmem:[%s271 + $0x80] sm:$0xff]
        %v1834 = vld [vmem:[%s271 + $0x88] sm:$0xff]
        %v1835 = vld [vmem:[%s271 + $0x90] sm:$0xff]
        %v1836 = vld [vmem:[%s271 + $0x98] sm:$0xff]
        %v1837 = vld [vmem:[%s271 + $0xa0] sm:$0xff]
        %v1838 = vld [vmem:[%s271 + $0xa8] sm:$0xff]
        %v1839 = vld [vmem:[%s271 + $0xb0] sm:$0xff]
        %v1840 = vld [vmem:[%s271 + $0xb8] sm:$0xff]
        %v1841 = vld [vmem:[%s271 + $0xc0] sm:$0xff]
        %v1842 = vld [vmem:[%s271 + $0xc8] sm:$0xff]
        %v1843 = vld [vmem:[%s271 + $0xd0] sm:$0xff]
        %v1844 = vld [vmem:[%s271 + $0xd8] sm:$0xff]
        %v1845 = vld [vmem:[%s271 + $0xe0] sm:$0xff]
        %v1846 = vld [vmem:[%s271 + $0xe8] sm:$0xff]
        %v1847 = vld [vmem:[%s271 + $0xf0] sm:$0xff]
        %v1848 = vld [vmem:[%s271 + $0xf8] sm:$0xff]
        %1850 = vset.pattern.permute.xlu0 0
        %1851 = vperm.xlu0 %1850, %v1817
        %v1852 = vpop.permute.xlu0 %1851
        %1855 = vset.pattern.permute.xlu0 0
        %1856 = vperm.xlu0 %1855, %v1818
        %v1857 = vpop.permute.xlu0 %1856
        %1860 = vset.pattern.permute.xlu0 0
        %1861 = vperm.xlu0 %1860, %v1819
        %v1862 = vpop.permute.xlu0 %1861
        %1865 = vset.pattern.permute.xlu0 0
        %1866 = vperm.xlu0 %1865, %v1820
        %v1867 = vpop.permute.xlu0 %1866
        %1870 = vset.pattern.permute.xlu0 0
        %1871 = vperm.xlu0 %1870, %v1821
        %v1872 = vpop.permute.xlu0 %1871
        %1875 = vset.pattern.permute.xlu0 0
        %1876 = vperm.xlu0 %1875, %v1822
        %v1877 = vpop.permute.xlu0 %1876
        %1880 = vset.pattern.permute.xlu0 0
        %1881 = vperm.xlu0 %1880, %v1823
        %v1882 = vpop.permute.xlu0 %1881
        %1885 = vset.pattern.permute.xlu0 0
        %1886 = vperm.xlu0 %1885, %v1824
        %v1887 = vpop.permute.xlu0 %1886
        %1890 = vset.pattern.permute.xlu0 0
        %1891 = vperm.xlu0 %1890, %v1825
        %v1892 = vpop.permute.xlu0 %1891
        %1895 = vset.pattern.permute.xlu0 0
        %1896 = vperm.xlu0 %1895, %v1826
        %v1897 = vpop.permute.xlu0 %1896
        %1900 = vset.pattern.permute.xlu0 0
        %1901 = vperm.xlu0 %1900, %v1827
        %v1902 = vpop.permute.xlu0 %1901
        %1905 = vset.pattern.permute.xlu0 0
        %1906 = vperm.xlu0 %1905, %v1828
        %v1907 = vpop.permute.xlu0 %1906
        %1910 = vset.pattern.permute.xlu0 0
        %1911 = vperm.xlu0 %1910, %v1829
        %v1912 = vpop.permute.xlu0 %1911
        %1915 = vset.pattern.permute.xlu0 0
        %1916 = vperm.xlu0 %1915, %v1830
        %v1917 = vpop.permute.xlu0 %1916
        %1920 = vset.pattern.permute.xlu0 0
        %1921 = vperm.xlu0 %1920, %v1831
        %v1922 = vpop.permute.xlu0 %1921
        %1925 = vset.pattern.permute.xlu0 0
        %1926 = vperm.xlu0 %1925, %v1832
        %v1927 = vpop.permute.xlu0 %1926
        %1930 = vset.pattern.permute.xlu0 0
        %1931 = vperm.xlu0 %1930, %v1833
        %v1932 = vpop.permute.xlu0 %1931
        %1935 = vset.pattern.permute.xlu0 0
        %1936 = vperm.xlu0 %1935, %v1834
        %v1937 = vpop.permute.xlu0 %1936
        %1940 = vset.pattern.permute.xlu0 0
        %1941 = vperm.xlu0 %1940, %v1835
        %v1942 = vpop.permute.xlu0 %1941
        %1945 = vset.pattern.permute.xlu0 0
        %1946 = vperm.xlu0 %1945, %v1836
        %v1947 = vpop.permute.xlu0 %1946
        %1950 = vset.pattern.permute.xlu0 0
        %1951 = vperm.xlu0 %1950, %v1837
        %v1952 = vpop.permute.xlu0 %1951
        %1955 = vset.pattern.permute.xlu0 0
        %1956 = vperm.xlu0 %1955, %v1838
        %v1957 = vpop.permute.xlu0 %1956
        %1960 = vset.pattern.permute.xlu0 0
        %1961 = vperm.xlu0 %1960, %v1839
        %v1962 = vpop.permute.xlu0 %1961
        %1965 = vset.pattern.permute.xlu0 0
        %1966 = vperm.xlu0 %1965, %v1840
        %v1967 = vpop.permute.xlu0 %1966
        %1970 = vset.pattern.permute.xlu0 0
        %1971 = vperm.xlu0 %1970, %v1841
        %v1972 = vpop.permute.xlu0 %1971
        %1975 = vset.pattern.permute.xlu0 0
        %1976 = vperm.xlu0 %1975, %v1842
        %v1977 = vpop.permute.xlu0 %1976
        %1980 = vset.pattern.permute.xlu0 0
        %1981 = vperm.xlu0 %1980, %v1843
        %v1982 = vpop.permute.xlu0 %1981
        %1985 = vset.pattern.permute.xlu0 0
        %1986 = vperm.xlu0 %1985, %v1844
        %v1987 = vpop.permute.xlu0 %1986
        %1990 = vset.pattern.permute.xlu0 0
        %1991 = vperm.xlu0 %1990, %v1845
        %v1992 = vpop.permute.xlu0 %1991
        %1995 = vset.pattern.permute.xlu0 0
        %1996 = vperm.xlu0 %1995, %v1846
        %v1997 = vpop.permute.xlu0 %1996
        %2000 = vset.pattern.permute.xlu0 0
        %2001 = vperm.xlu0 %2000, %v1847
        %v2002 = vpop.permute.xlu0 %2001
        %2005 = vset.pattern.permute.xlu0 0
        %2006 = vperm.xlu0 %2005, %v1848
        %v2007 = vpop.permute.xlu0 %2006
        %v2009 = vmul.f32 %v1785, %v1852
        %v2010 = vmul.f32 %v1786, %v1857
        %v2011 = vmul.f32 %v1787, %v1862
        %v2012 = vmul.f32 %v1788, %v1867
        %v2013 = vmul.f32 %v1789, %v1872
        %v2014 = vmul.f32 %v1790, %v1877
        %v2015 = vmul.f32 %v1791, %v1882
        %v2016 = vmul.f32 %v1792, %v1887
        %v2017 = vmul.f32 %v1793, %v1892
        %v2018 = vmul.f32 %v1794, %v1897
        %v2019 = vmul.f32 %v1795, %v1902
        %v2020 = vmul.f32 %v1796, %v1907
        %v2021 = vmul.f32 %v1797, %v1912
        %v2022 = vmul.f32 %v1798, %v1917
        %v2023 = vmul.f32 %v1799, %v1922
        %v2024 = vmul.f32 %v1800, %v1927
        %v2025 = vmul.f32 %v1801, %v1932
        %v2026 = vmul.f32 %v1802, %v1937
        %v2027 = vmul.f32 %v1803, %v1942
        %v2028 = vmul.f32 %v1804, %v1947
        %v2029 = vmul.f32 %v1805, %v1952
        %v2030 = vmul.f32 %v1806, %v1957
        %v2031 = vmul.f32 %v1807, %v1962
        %v2032 = vmul.f32 %v1808, %v1967
        %v2033 = vmul.f32 %v1809, %v1972
        %v2034 = vmul.f32 %v1810, %v1977
        %v2035 = vmul.f32 %v1811, %v1982
        %v2036 = vmul.f32 %v1812, %v1987
        %v2037 = vmul.f32 %v1813, %v1992
        %v2038 = vmul.f32 %v1814, %v1997
        %v2039 = vmul.f32 %v1815, %v2002
        %v2040 = vmul.f32 %v1816, %v2007
        %2041 = vst [vmem:[%s300] sm:$0xff] %v2009
        %2042 = vst [vmem:[%s300 + $0x8] sm:$0xff] %v2010
        %2043 = vst [vmem:[%s300 + $0x10] sm:$0xff] %v2011
        %2044 = vst [vmem:[%s300 + $0x18] sm:$0xff] %v2012
        %2045 = vst [vmem:[%s300 + $0x20] sm:$0xff] %v2013
        %2046 = vst [vmem:[%s300 + $0x28] sm:$0xff] %v2014
        %2047 = vst [vmem:[%s300 + $0x30] sm:$0xff] %v2015
        %2048 = vst [vmem:[%s300 + $0x38] sm:$0xff] %v2016
        %2049 = vst [vmem:[%s300 + $0x40] sm:$0xff] %v2017
        %2050 = vst [vmem:[%s300 + $0x48] sm:$0xff] %v2018
        %2051 = vst [vmem:[%s300 + $0x50] sm:$0xff] %v2019
        %2052 = vst [vmem:[%s300 + $0x58] sm:$0xff] %v2020
        %2053 = vst [vmem:[%s300 + $0x60] sm:$0xff] %v2021
        %2054 = vst [vmem:[%s300 + $0x68] sm:$0xff] %v2022
        %2055 = vst [vmem:[%s300 + $0x70] sm:$0xff] %v2023
        %2056 = vst [vmem:[%s300 + $0x78] sm:$0xff] %v2024
        %2057 = vst [vmem:[%s300 + $0x80] sm:$0xff] %v2025
        %2058 = vst [vmem:[%s300 + $0x88] sm:$0xff] %v2026
        %2059 = vst [vmem:[%s300 + $0x90] sm:$0xff] %v2027
        %2060 = vst [vmem:[%s300 + $0x98] sm:$0xff] %v2028
        %2061 = vst [vmem:[%s300 + $0xa0] sm:$0xff] %v2029
        %2062 = vst [vmem:[%s300 + $0xa8] sm:$0xff] %v2030
        %2063 = vst [vmem:[%s300 + $0xb0] sm:$0xff] %v2031
        %2064 = vst [vmem:[%s300 + $0xb8] sm:$0xff] %v2032
        %2065 = vst [vmem:[%s300 + $0xc0] sm:$0xff] %v2033
        %2066 = vst [vmem:[%s300 + $0xc8] sm:$0xff] %v2034
        %2067 = vst [vmem:[%s300 + $0xd0] sm:$0xff] %v2035
        %2068 = vst [vmem:[%s300 + $0xd8] sm:$0xff] %v2036
        %2069 = vst [vmem:[%s300 + $0xe0] sm:$0xff] %v2037
        %2070 = vst [vmem:[%s300 + $0xe8] sm:$0xff] %v2038
        %2071 = vst [vmem:[%s300 + $0xf0] sm:$0xff] %v2039
        %2072 = vst [vmem:[%s300 + $0xf8] sm:$0xff] %v2040
        %s2073 = sand.u32 %s143, 1
        %s2074 = scalar_lea.sflag [#allocation4], %s2073
        %s2075 = sand.u32 %s143, 1
        %s2076 = smul.addr %s2075, 256
        %s2077 = scalar_lea.vmem [#allocation10], %s2076
        // Predicated region
        $region53: #{tpu_custom_call.1} parent=35 // pred_check
          %p2078 = pneg %p153
        $region54: #{tpu_custom_call.1} parent=35 // pred_check_branch
          %2080 = sbr.rel (%p2078) target = $region56
        $region55: #{tpu_custom_call.1} parent=35 // pred_region
          %s2081 = smul.u32 32, %s30
          %s2083 = ssub.s32 4096, 4096
          %2084 = vsyncadd %s2074, %s2083
          %s2085 = smul.addr %s29, 32
          %s2086 = sadd.s32 %s2081, %s2085
          %s2087 = smul.addr %s2086, 128
          %s2088 = scalar_lea.hbm %s4, %s2087
          %s2089 = sshll.u32 %s2077, 4
          %s2090 = int_to_ptr.vmem [resolvable:$true] %s2089
          %2095 = dma.vmem_to_hbm [thread:$0]  %s2090, 4096, %s2088, %s2074, 128, 128, 8
        $region56: #{tpu_custom_call.1} parent=35 // pred_fallthru
          _
      $region36: #{tpu_custom_call.1} parent=5 // pred_fallthru
        _
      %p2096 = scmp.le.s32.totalorder 2, %s20
      // Predicated region
      $region57: #{tpu_custom_call.1} parent=5 // pred_check
        %p2097 = pneg %p2096
      $region58: #{tpu_custom_call.1} parent=5 // pred_check_branch
        %2099 = sbr.rel (%p2097) target = $region60
      $region59: #{tpu_custom_call.1} parent=5 // pred_region
        %s2100 = ssub.s32 %s20, 2
        // Predicated region
        $region61: #{tpu_custom_call.1} parent=59 // pred_check
          %p2101 = pneg %p159
        $region62: #{tpu_custom_call.1} parent=59 // pred_check_branch
          %2103 = sbr.rel (%p2101) target = $region64
        $region63: #{tpu_custom_call.1} parent=59 // pred_region
          %s2104 = sand.u32 %s144, 1
          %s2105 = scalar_lea.sflag [#allocation4], %s2104
          %s2106 = sand.u32 %s144, 1
          %s2107 = smul.addr %s2106, 256
          %s2108 = scalar_lea.vmem [#allocation10], %s2107
          %2109 = dma.done %s2105, 4096
        $region64: #{tpu_custom_call.1} parent=59 // pred_fallthru
          _
      $region60: #{tpu_custom_call.1} parent=5 // pred_fallthru
        _
    $region6: #{tpu_custom_call.1} parent=1 // loop_footer
      %s24 = sadd.s32 1, %s20
    $region7: #{tpu_custom_call.1} parent=1 // loop_footer_branch
      %19 = sbr.rel target = $region3
    $region8: #{tpu_custom_call.1} parent=1 // loop_exit
      _
    %2110 = vsyncpa [#allocation3], 1
    %s2111 = scalar_lea.sflag [#allocation3], 1
    %2112 = vsyncpa %s2111, 1
    %2113 = vsyncpa [#allocation6], 1
    %2114 = vsyncpa [#allocation9], 1
    %s2115 = scalar_lea.sflag [#allocation9], 1
    %2116 = vsyncpa %s2115, 1
    %2117 = vsyncpa [#allocation4], 1
    %s2118 = scalar_lea.sflag [#allocation4], 1
    %2119 = vsyncpa %s2118, 1

</llo_original>
